<compile_context>
chip_gen: v5e
topology: v5e:2x2
jax: 0.10.0
libtpu: 0.0.40
codegen_flags: <defaults>
</compile_context>

<pallas_src>
import jax
import jax.numpy as jnp
from jax import lax
from jax.experimental import pallas as pl
from jax.experimental.pallas import tpu as pltpu

EPS = 1e-5


def _round_up(n, m):
    return ((n + m - 1) // m) * m


def _vmem_budget_bytes():
    """Scoped-VMEM budget per TPU generation (v7x: 64 MiB phys -> ~48 MiB usable;
    v5e/v6e: 128 MiB -> ~96 MiB). Conservative fallback if the query is unavailable."""
    try:
        cap = int(pltpu.get_tpu_info().vmem_capacity_bytes)
    except Exception:
        cap = 64 * 1024 * 1024  # assume the smallest (v7x-sized) VMEM
    return min(cap * 3 // 4, 100 * 1024 * 1024)


def _bn_scale_shift(s, ss, gamma, beta, inv_n):
    """Fold biased batch statistics + affine params into one per-feature scale/shift.

    Statistics are accumulated on the *bias-shifted* pre-activations (x @ W, no +b):
    a Linear bias immediately followed by training-mode BatchNorm cancels exactly, and
    shifting also reduces E[h^2]-E[h]^2 cancellation.
    """
    m0 = s * inv_n
    var = jnp.maximum(ss * inv_n - m0 * m0, 0.0)  # biased variance (PyTorch train mode)
    scale = gamma * lax.rsqrt(var + EPS)
    shift = beta - m0 * scale
    return scale, shift


# ----------------------------------------------------------------------------------
# Regime 1: single-shot kernel — whole batch resident in VMEM, one grid step.
# ----------------------------------------------------------------------------------
def _make_single_shot_kernel(batch):
    inv_n = 1.0 / float(batch)

    def kernel(x_ref, w1_ref, g1_ref, be1_ref, w2_ref, g2_ref, be2_ref,
               w3_ref, b3_ref, o_ref):
        h1 = jnp.dot(x_ref[...], w1_ref[...], preferred_element_type=jnp.float32)
        sc1, sh1 = _bn_scale_shift(jnp.sum(h1, axis=0, keepdims=True),
                                   jnp.sum(h1 * h1, axis=0, keepdims=True),
                                   g1_ref[...], be1_ref[...], inv_n)
        a1 = jnp.maximum(h1 * sc1 + sh1, 0.0)
        h2 = jnp.dot(a1.astype(w2_ref.dtype), w2_ref[...],
                     preferred_element_type=jnp.float32)
        sc2, sh2 = _bn_scale_shift(jnp.sum(h2, axis=0, keepdims=True),
                                   jnp.sum(h2 * h2, axis=0, keepdims=True),
                                   g2_ref[...], be2_ref[...], inv_n)
        a2 = jnp.maximum(h2 * sc2 + sh2, 0.0)
        # fc3 has N=1: VPU multiply + lane reduction instead of a 1-column MXU matmul.
        logits = jnp.sum(a2 * w3_ref[...], axis=-1, keepdims=True) + b3_ref[...]
        o_ref[...] = jax.nn.sigmoid(logits)

    return kernel


# ----------------------------------------------------------------------------------
# Regime 2: 3-phase batch-tiled kernel (BN1 stats, BN2 stats, forward).
# ----------------------------------------------------------------------------------
def _make_tiled_kernel(batch, pad_rows):
    inv_n = 1.0 / float(batch)

    def kernel(x_ref, w1_ref, g1_ref, be1_ref, w2_ref, g2_ref, be2_ref,
               w3_ref, b3_ref, o_ref,
               sum1, sumsq1, sum2, sumsq2, scale1, shift1, scale2, shift2):
        phase = pl.program_id(0)
        tile = pl.program_id(1)

        def fc1():
            # Bias-shifted (no +b1): zero-padded rows contribute exactly 0 to BN1
            # stats, so no per-row mask is needed anywhere in the hot path.
            return jnp.dot(x_ref[...], w1_ref[...], preferred_element_type=jnp.float32)

        def fc2(a1):
            return jnp.dot(a1.astype(w2_ref.dtype), w2_ref[...],
                           preferred_element_type=jnp.float32)

        def layer1():
            return jnp.maximum(fc1() * scale1[...] + shift1[...], 0.0)

        @pl.when(jnp.logical_and(phase == 0, tile == 0))
        def _init():
            sum1[...] = jnp.zeros_like(sum1)
            sumsq1[...] = jnp.zeros_like(sumsq1)
            sum2[...] = jnp.zeros_like(sum2)
            sumsq2[...] = jnp.zeros_like(sumsq2)

        @pl.when(phase == 0)  # accumulate BN1 batch statistics
        def _p0():
            h1 = fc1()
            sum1[...] += jnp.sum(h1, axis=0, keepdims=True)
            sumsq1[...] += jnp.sum(h1 * h1, axis=0, keepdims=True)

        @pl.when(jnp.logical_and(phase == 1, tile == 0))  # finalize BN1 once (hoisted)
        def _fin1():
            sc, sh = _bn_scale_shift(sum1[...], sumsq1[...],
                                     g1_ref[...], be1_ref[...], inv_n)
            scale1[...] = sc
            shift1[...] = sh

        @pl.when(phase == 1)  # accumulate BN2 batch statistics
        def _p1():
            h2 = fc2(layer1())
            sum2[...] += jnp.sum(h2, axis=0, keepdims=True)
            sumsq2[...] += jnp.sum(h2 * h2, axis=0, keepdims=True)

        @pl.when(jnp.logical_and(phase == 2, tile == 0))  # finalize BN2 once (hoisted)
        def _fin2():
            if pad_rows > 0:  # static: padded rows (x == 0) contributed a known constant
                a1_pad = jnp.maximum(shift1[...], 0.0)            # relu(0*scale1 + shift1)
                d = jnp.dot(a1_pad.astype(w2_ref.dtype), w2_ref[...],
                            preferred_element_type=jnp.float32)
                sum2[...] = sum2[...] - float(pad_rows) * d
                sumsq2[...] = sumsq2[...] - float(pad_rows) * (d * d)
            sc, sh = _bn_scale_shift(sum2[...], sumsq2[...],
                                     g2_ref[...], be2_ref[...], inv_n)
            scale2[...] = sc
            shift2[...] = sh

        @pl.when(phase == 2)  # full forward + sigmoid output
        def _p2():
            a2 = jnp.maximum(fc2(layer1()) * scale2[...] + shift2[...], 0.0)
            logits = jnp.sum(a2 * w3_ref[...], axis=-1, keepdims=True) + b3_ref[...]
            o_ref[...] = jax.nn.sigmoid(logits)

    return kernel


def fall_detection_forward(x, params, *, tile_b=8192, dtype=jnp.bfloat16,
                           single_shot=None, vmem_limit_bytes=None):
    """x: (B, input_size) float32.  Returns (B, 1) float32 probabilities.

    Matches PyTorch training-mode BatchNorm1d semantics.  `dtype` is the storage dtype
    of x / w1 / w2 (bf16 default halves the dominant HBM traffic; accumulation stays
    f32).  `single_shot=None` auto-selects the whole-batch-in-VMEM regime when it fits.
    """
    batch, in_features = x.shape
    (w1, b1, g1, be1, w2, b2, g2, be2, w3, b3) = params
    # b1/b2 are accepted for interface parity but cancel exactly under train-mode BN.
    del b1, b2
    hidden = w1.shape[1]
    hidden2 = w2.shape[1]

    itemsize = jnp.dtype(dtype).itemsize
    budget = int(vmem_limit_bytes) if vmem_limit_bytes else _vmem_budget_bytes()
    usable = int(budget * 0.6)  # headroom for compiler scratch / regalloc

    # Rough lane-padded VMEM bytes per batch row (x, out, live f32 intermediates).
    row_bytes_single = 128 * itemsize + 128 * 4 + 4 * 128 * 4
    row_bytes_tiled = 2 * 128 * itemsize + 2 * 128 * 4 + 4 * 128 * 4  # dbl-buffered x/out

    x = x.astype(dtype)
    w1c, w2c = w1.astype(dtype), w2.astype(dtype)
    w3_row = w3.reshape(1, hidden2).astype(jnp.float32)
    common_params = (w1c, g1, be1, w2c, g2, be2, w3_row, b3)

    if single_shot is None:
        single_shot = batch * row_bytes_single <= usable

    if single_shot:
        # Whole batch resident: x fetched from HBM exactly once, each matmul runs once.
        cost = pl.CostEstimate(
            flops=2 * batch * (in_features * hidden + hidden * hidden2 + hidden2),
            transcendentals=batch + hidden + hidden2,
            bytes_accessed=batch * in_features * itemsize + batch * 4
            + (w1.size + w2.size) * itemsize + (w3.size + 2 * (hidden + hidden2) + 1) * 4)
        return pl.pallas_call(
            _make_single_shot_kernel(batch),
            out_shape=jax.ShapeDtypeStruct((batch, 1), jnp.float32),
            compiler_params=pltpu.CompilerParams(vmem_limit_bytes=budget),
            cost_estimate=cost,
        )(x, *common_params)

    # ---- 3-phase tiled path ----
    cap_rows = max(32, (usable // row_bytes_tiled) // 32 * 32)
    tile_b = max(32, min(_round_up(int(tile_b), 32), cap_rows))
    if _round_up(batch, 32) < tile_b:
        tile_b = _round_up(batch, 32)
    padded = _round_up(batch, tile_b)
    n_tiles = padded // tile_b
    pad_rows = padded - batch

    if pad_rows:
        x = jnp.pad(x, ((0, pad_rows), (0, 0)))

    x_map = lambda p, i: (i, 0)
    param_map = lambda p, i: (0, 0)            # constant -> parameters resident in VMEM
    out_map = lambda p, i: (i * (p // 2), 0)   # only phase 2 walks the output blocks
    pspec = lambda shape: pl.BlockSpec(shape, param_map)

    grid_spec = pltpu.PrefetchScalarGridSpec(
        num_scalar_prefetch=0,
        grid=(3, n_tiles),  # (phase, batch tile); phase outermost
        in_specs=[
            pl.BlockSpec((tile_b, in_features), x_map),
            pspec((in_features, hidden)),   # w1
            pspec((1, hidden)),             # gamma1
            pspec((1, hidden)),             # beta1
            pspec((hidden, hidden2)),       # w2
            pspec((1, hidden2)),            # gamma2
            pspec((1, hidden2)),            # beta2
            pspec((1, hidden2)),            # w3 (as a row)
            pspec((1, 1)),                  # b3
        ],
        out_specs=pl.BlockSpec((tile_b, 1), out_map),
        scratch_shapes=[
            pltpu.VMEM((1, hidden), jnp.float32),   # sum1
            pltpu.VMEM((1, hidden), jnp.float32),   # sumsq1
            pltpu.VMEM((1, hidden2), jnp.float32),  # sum2
            pltpu.VMEM((1, hidden2), jnp.float32),  # sumsq2
            pltpu.VMEM((1, hidden), jnp.float32),   # scale1 (BN1 fused scale)
            pltpu.VMEM((1, hidden), jnp.float32),   # shift1 (BN1 fused shift)
            pltpu.VMEM((1, hidden2), jnp.float32),  # scale2
            pltpu.VMEM((1, hidden2), jnp.float32),  # shift2
        ],
    )

    cost = pl.CostEstimate(
        flops=2 * padded * (3 * in_features * hidden + 2 * hidden * hidden2 + hidden2),
        transcendentals=padded + hidden + hidden2,
        bytes_accessed=3 * padded * in_features * itemsize + padded * 4
        + (w1.size + w2.size) * itemsize + (w3.size + 2 * (hidden + hidden2) + 1) * 4)

    out = pl.pallas_call(
        _make_tiled_kernel(batch, pad_rows),
        out_shape=jax.ShapeDtypeStruct((padded, 1), jnp.float32),
        grid_spec=grid_spec,
        compiler_params=pltpu.CompilerParams(
            # Training-mode BN couples all batch tiles via scratch accumulators and the
            # 3 phases must run in order -> both axes stay "arbitrary".
            dimension_semantics=("arbitrary", "arbitrary"),
            vmem_limit_bytes=budget,
        ),
        cost_estimate=cost,
    )(x, *common_params)
    return out[:batch]


def init_params(key, input_size=34, hidden_size=128):
    h2 = hidden_size // 2
    ks = jax.random.split(key, 6)
    w1 = jax.random.normal(ks[0], (input_size, hidden_size), jnp.float32) * 0.1
    b1 = jax.random.normal(ks[1], (1, hidden_size), jnp.float32) * 0.1
    w2 = jax.random.normal(ks[2], (hidden_size, h2), jnp.float32) * 0.1
    b2 = jax.random.normal(ks[3], (1, h2), jnp.float32) * 0.1
    w3 = jax.random.normal(ks[4], (h2, 1), jnp.float32) * 0.1
    b3 = jax.random.normal(ks[5], (1, 1), jnp.float32) * 0.1
    g1 = jnp.ones((1, hidden_size), jnp.float32)   # BatchNorm gamma=1, beta=0 (PyTorch init)
    be1 = jnp.zeros((1, hidden_size), jnp.float32)
    g2 = jnp.ones((1, h2), jnp.float32)
    be2 = jnp.zeros((1, h2), jnp.float32)
    return (w1, b1, g1, be1, w2, b2, g2, be2, w3, b3)


def reference_forward(x, params):
    """Pure-JAX reference matching the PyTorch training-mode forward."""
    (w1, b1, g1, be1, w2, b2, g2, be2, w3, b3) = params

    def bn(h, g, b):
        mu = jnp.mean(h, axis=0, keepdims=True)
        var = jnp.mean((h - mu) ** 2, axis=0, keepdims=True)  # biased variance
        return g * (h - mu) * lax.rsqrt(var + EPS) + b

    h = jnp.maximum(bn(x @ w1 + b1, g1, be1), 0.0)
    h = jnp.maximum(bn(h @ w2 + b2, g2, be2), 0.0)
    return jax.nn.sigmoid(h @ w3 + b3)


if __name__ == "__main__":
    key = jax.random.PRNGKey(0)
    kx, kp = jax.random.split(key)

    B, input_size, hidden_size = 200, 34, 128
    x = jax.random.normal(kx, (B, input_size), jnp.float32)
    params = init_params(kp, input_size, hidden_size)

    ref = reference_forward(x, params)

    # f32, auto regime (single-shot: whole batch resident, one grid step).
    out = jax.block_until_ready(fall_detection_forward(x, params, dtype=jnp.float32))
    assert out.shape == (B, 1)
    assert jnp.allclose(out, ref, atol=1e-4, rtol=1e-4), float(jnp.max(jnp.abs(out - ref)))

    # f32, forced 3-phase tiled regime (4 batch tiles + 56 padded rows -> exercises the
    # cross-tile stat accumulation and the analytic padded-row correction).
    out_t = jax.block_until_ready(
        fall_detection_forward(x, params, dtype=jnp.float32, single_shot=False, tile_b=64))
    assert jnp.allclose(out_t, ref, atol=1e-4, rtol=1e-4), float(jnp.max(jnp.abs(out_t - ref)))

    # Default bf16 storage (halves HBM traffic); looser tolerance for reduced precision.
    out_bf = jax.block_until_ready(fall_detection_forward(x, params))
    assert jnp.allclose(out_bf, ref, atol=3e-2, rtol=3e-2), float(jnp.max(jnp.abs(out_bf - ref)))

    out_bf_t = jax.block_until_ready(
        fall_detection_forward(x, params, single_shot=False, tile_b=64))
    assert jnp.allclose(out_bf_t, ref, atol=3e-2, rtol=3e-2), float(jnp.max(jnp.abs(out_bf_t - ref)))

    print("KERNEL_OK")
</pallas_src>

<mosaic_0001>
module attributes {stable_mosaic.version = 11 : i64} {
  func.func @kernel(%arg0: memref<200x34xf32, #tpu.memory_space<vmem>>, %arg1: memref<34x128xf32, #tpu.memory_space<vmem>>, %arg2: memref<1x128xf32, #tpu.memory_space<vmem>>, %arg3: memref<1x128xf32, #tpu.memory_space<vmem>>, %arg4: memref<128x64xf32, #tpu.memory_space<vmem>>, %arg5: memref<1x64xf32, #tpu.memory_space<vmem>>, %arg6: memref<1x64xf32, #tpu.memory_space<vmem>>, %arg7: memref<1x64xf32, #tpu.memory_space<vmem>>, %arg8: memref<1x1xf32, #tpu.memory_space<vmem>>, %arg9: memref<200x1xf32, #tpu.memory_space<vmem>>) attributes {dimension_semantics = [], scalar_prefetch = 0 : i64, scratch_operands = 0 : i64, tpu.core_type = #tpu.core_type<tc>} {
    %c0 = arith.constant 0 : index
    %c0_0 = arith.constant 0 : index
    %0 = vector.load %arg0[%c0, %c0_0] : memref<200x34xf32, #tpu.memory_space<vmem>>, vector<200x34xf32>
    %c0_1 = arith.constant 0 : index
    %c0_2 = arith.constant 0 : index
    %1 = vector.load %arg1[%c0_1, %c0_2] : memref<34x128xf32, #tpu.memory_space<vmem>>, vector<34x128xf32>
    %cst = arith.constant dense<0.000000e+00> : vector<200x128xf32>
    %2 = tpu.matmul %0, %1, %cst {dimension_numbers = #tpu.dot_dimension_numbers<[1], [0], [0], [1], [0, 0, 1, 1], [], []>} : vector<200x34xf32>, vector<34x128xf32>, vector<200x128xf32> -> vector<200x128xf32>
    %cst_3 = arith.constant dense<0.000000e+00> : vector<128xf32>
    %3 = vector.multi_reduction <add>, %2, %cst_3 [0] : vector<200x128xf32> to vector<128xf32>
    %4 = vector.shape_cast %3 : vector<128xf32> to vector<1x128xf32>
    %5 = arith.mulf %2, %2 : vector<200x128xf32>
    %cst_4 = arith.constant dense<0.000000e+00> : vector<128xf32>
    %6 = vector.multi_reduction <add>, %5, %cst_4 [0] : vector<200x128xf32> to vector<128xf32>
    %7 = vector.shape_cast %6 : vector<128xf32> to vector<1x128xf32>
    %c0_5 = arith.constant 0 : index
    %c0_6 = arith.constant 0 : index
    %8 = vector.load %arg2[%c0_5, %c0_6] : memref<1x128xf32, #tpu.memory_space<vmem>>, vector<1x128xf32>
    %c0_7 = arith.constant 0 : index
    %c0_8 = arith.constant 0 : index
    %9 = vector.load %arg3[%c0_7, %c0_8] : memref<1x128xf32, #tpu.memory_space<vmem>>, vector<1x128xf32>
    %cst_9 = arith.constant 5.000000e-03 : f32
    %10 = vector.broadcast %cst_9 : f32 to vector<1x128xf32>
    %11 = arith.mulf %4, %10 : vector<1x128xf32>
    %cst_10 = arith.constant 5.000000e-03 : f32
    %12 = vector.broadcast %cst_10 : f32 to vector<1x128xf32>
    %13 = arith.mulf %7, %12 : vector<1x128xf32>
    %14 = arith.mulf %11, %11 : vector<1x128xf32>
    %15 = arith.subf %13, %14 : vector<1x128xf32>
    %cst_11 = arith.constant 0.000000e+00 : f32
    %16 = vector.broadcast %cst_11 : f32 to vector<1x128xf32>
    %17 = arith.maximumf %15, %16 : vector<1x128xf32>
    %cst_12 = arith.constant 9.99999974E-6 : f32
    %18 = vector.broadcast %cst_12 : f32 to vector<1x128xf32>
    %19 = arith.addf %17, %18 : vector<1x128xf32>
    %20 = math.rsqrt %19 : vector<1x128xf32>
    %21 = arith.mulf %8, %20 : vector<1x128xf32>
    %22 = arith.mulf %11, %21 : vector<1x128xf32>
    %23 = arith.subf %9, %22 : vector<1x128xf32>
    %24 = vector.broadcast %21 : vector<1x128xf32> to vector<200x128xf32>
    %25 = arith.mulf %2, %24 : vector<200x128xf32>
    %26 = vector.broadcast %23 : vector<1x128xf32> to vector<200x128xf32>
    %27 = arith.addf %25, %26 : vector<200x128xf32>
    %cst_13 = arith.constant 0.000000e+00 : f32
    %28 = vector.broadcast %cst_13 : f32 to vector<200x128xf32>
    %29 = arith.maximumf %27, %28 : vector<200x128xf32>
    %c0_14 = arith.constant 0 : index
    %c0_15 = arith.constant 0 : index
    %30 = vector.load %arg4[%c0_14, %c0_15] : memref<128x64xf32, #tpu.memory_space<vmem>>, vector<128x64xf32>
    %cst_16 = arith.constant dense<0.000000e+00> : vector<200x64xf32>
    %31 = tpu.matmul %29, %30, %cst_16 {dimension_numbers = #tpu.dot_dimension_numbers<[1], [0], [0], [1], [0, 0, 1, 1], [], []>} : vector<200x128xf32>, vector<128x64xf32>, vector<200x64xf32> -> vector<200x64xf32>
    %cst_17 = arith.constant dense<0.000000e+00> : vector<64xf32>
    %32 = vector.multi_reduction <add>, %31, %cst_17 [0] : vector<200x64xf32> to vector<64xf32>
    %33 = vector.shape_cast %32 : vector<64xf32> to vector<1x64xf32>
    %34 = arith.mulf %31, %31 : vector<200x64xf32>
    %cst_18 = arith.constant dense<0.000000e+00> : vector<64xf32>
    %35 = vector.multi_reduction <add>, %34, %cst_18 [0] : vector<200x64xf32> to vector<64xf32>
    %36 = vector.shape_cast %35 : vector<64xf32> to vector<1x64xf32>
    %c0_19 = arith.constant 0 : index
    %c0_20 = arith.constant 0 : index
    %37 = vector.load %arg5[%c0_19, %c0_20] : memref<1x64xf32, #tpu.memory_space<vmem>>, vector<1x64xf32>
    %c0_21 = arith.constant 0 : index
    %c0_22 = arith.constant 0 : index
    %38 = vector.load %arg6[%c0_21, %c0_22] : memref<1x64xf32, #tpu.memory_space<vmem>>, vector<1x64xf32>
    %cst_23 = arith.constant 5.000000e-03 : f32
    %39 = vector.broadcast %cst_23 : f32 to vector<1x64xf32>
    %40 = arith.mulf %33, %39 : vector<1x64xf32>
    %cst_24 = arith.constant 5.000000e-03 : f32
    %41 = vector.broadcast %cst_24 : f32 to vector<1x64xf32>
    %42 = arith.mulf %36, %41 : vector<1x64xf32>
    %43 = arith.mulf %40, %40 : vector<1x64xf32>
    %44 = arith.subf %42, %43 : vector<1x64xf32>
    %cst_25 = arith.constant 0.000000e+00 : f32
    %45 = vector.broadcast %cst_25 : f32 to vector<1x64xf32>
    %46 = arith.maximumf %44, %45 : vector<1x64xf32>
    %cst_26 = arith.constant 9.99999974E-6 : f32
    %47 = vector.broadcast %cst_26 : f32 to vector<1x64xf32>
    %48 = arith.addf %46, %47 : vector<1x64xf32>
    %49 = math.rsqrt %48 : vector<1x64xf32>
    %50 = arith.mulf %37, %49 : vector<1x64xf32>
    %51 = arith.mulf %40, %50 : vector<1x64xf32>
    %52 = arith.subf %38, %51 : vector<1x64xf32>
    %53 = vector.broadcast %50 : vector<1x64xf32> to vector<200x64xf32>
    %54 = arith.mulf %31, %53 : vector<200x64xf32>
    %55 = vector.broadcast %52 : vector<1x64xf32> to vector<200x64xf32>
    %56 = arith.addf %54, %55 : vector<200x64xf32>
    %cst_27 = arith.constant 0.000000e+00 : f32
    %57 = vector.broadcast %cst_27 : f32 to vector<200x64xf32>
    %58 = arith.maximumf %56, %57 : vector<200x64xf32>
    %c0_28 = arith.constant 0 : index
    %c0_29 = arith.constant 0 : index
    %59 = vector.load %arg7[%c0_28, %c0_29] : memref<1x64xf32, #tpu.memory_space<vmem>>, vector<1x64xf32>
    %60 = vector.broadcast %59 : vector<1x64xf32> to vector<200x64xf32>
    %61 = arith.mulf %58, %60 : vector<200x64xf32>
    %cst_30 = arith.constant dense<0.000000e+00> : vector<200xf32>
    %62 = vector.multi_reduction <add>, %61, %cst_30 [1] : vector<200x64xf32> to vector<200xf32>
    %63 = vector.shape_cast %62 : vector<200xf32> to vector<200x1xf32>
    %c0_31 = arith.constant 0 : index
    %c0_32 = arith.constant 0 : index
    %64 = vector.load %arg8[%c0_31, %c0_32] : memref<1x1xf32, #tpu.memory_space<vmem>>, vector<1x1xf32>
    %65 = vector.broadcast %64 : vector<1x1xf32> to vector<200x1xf32>
    %66 = arith.addf %63, %65 : vector<200x1xf32>
    %67 = arith.negf %66 : vector<200x1xf32>
    %68 = math.exp %67 : vector<200x1xf32>
    %cst_33 = arith.constant 1.000000e+00 : f32
    %69 = vector.broadcast %cst_33 : f32 to vector<200x1xf32>
    %70 = arith.addf %69, %68 : vector<200x1xf32>
    %71 = arith.divf %69, %70 : vector<200x1xf32>
    %c0_34 = arith.constant 0 : index
    %c0_35 = arith.constant 0 : index
    %72 = vector.load %arg9[%c0_34, %c0_35] : memref<200x1xf32, #tpu.memory_space<vmem>>, vector<200x1xf32>
    tpu.vector_store %arg9[%c0_34, %c0_35], %71 {strides = array<i32>} : memref<200x1xf32, #tpu.memory_space<vmem>>, vector<200x1xf32>,
    return
  }
}

</mosaic_0001>

<llo_original>
// kernel: tpu_custom_call.1
$region0: #{tpu_custom_call.1}
  #allocation0 [shape = 'u32[]', space=smem, size = 0x4, offset = 0x4, fixed_abs, tag = 'smem constant byte address 0x4 - core index']
  #allocation1 [shape = 'u32[72,128]{1,0:T(1,128)}', space=vmem, size = 0x9000, scoped, tag = 'internal scratch']
  #allocation2 [shape = 'f32[1,1]{1,0:T(1,128)S(1)}', space=vmem, size = 0x200, scoped, tag = 'scoped memory for tpu_custom_call.1']
  %s0 = inlined_call_operand.vmem [shape: f32[200,34], index: 0, kind: input, shape index: {}]
  %s1 = inlined_call_operand.vmem [shape: f32[34,128], index: 1, kind: input, shape index: {}]
  %s2 = inlined_call_operand.vmem [shape: f32[1,128], index: 2, kind: input, shape index: {}]
  %s3 = inlined_call_operand.vmem [shape: f32[1,128], index: 3, kind: input, shape index: {}]
  %s4 = inlined_call_operand.vmem [shape: f32[128,64], index: 4, kind: input, shape index: {}]
  %s5 = inlined_call_operand.vmem [shape: f32[1,64], index: 5, kind: input, shape index: {}]
  %s6 = inlined_call_operand.vmem [shape: f32[1,64], index: 6, kind: input, shape index: {}]
  %s7 = inlined_call_operand.vmem [shape: f32[1,64], index: 7, kind: input, shape index: {}]
  %s8 = inlined_call_operand.<no memory space> [shape: f32[1,1], index: 8, kind: input, shape index: {}]
  %s9 = inlined_call_operand.vmem [shape: f32[200,1], index: 9, kind: output, shape index: {}]
  %s10 = sld [smem:[#allocation0]]
  $region46: #{tpu_custom_call.1} parent=0
    _
  %s12 = ssub.s32 1, %s10
  %s13 = scalar_select 0, %s12, %s10
  %v14 = vstv %s8
  %15 = vst [vmem:[#allocation2] sm:$0x1] %v14
  // Predicated region
  $region2: #{tpu_custom_call.1} parent=0 // pred_check
    _
  $region3: #{tpu_custom_call.1} parent=0 // pred_check_branch
    %17 = sbr.rel (0) target = $region5
  $region4: #{tpu_custom_call.1} parent=0 // pred_region
    _
  $region5: #{tpu_custom_call.1} parent=0 // pred_fallthru
    _
  // Predicated region
  $region6: #{tpu_custom_call.1} parent=0 // pred_check
    _
  $region7: #{tpu_custom_call.1} parent=0 // pred_check_branch
    %19 = sbr.rel (0) target = $region9
  $region8: #{tpu_custom_call.1} parent=0 // pred_region
    _
  $region9: #{tpu_custom_call.1} parent=0 // pred_fallthru
    _
  // Predicated region
  $region10: #{tpu_custom_call.1} parent=0 // pred_check
    _
  $region11: #{tpu_custom_call.1} parent=0 // pred_check_branch
    %21 = sbr.rel (0) target = $region13
  $region12: #{tpu_custom_call.1} parent=0 // pred_region
    _
  $region13: #{tpu_custom_call.1} parent=0 // pred_fallthru
    _
  // Predicated region
  $region14: #{tpu_custom_call.1} parent=0 // pred_check
    _
  $region15: #{tpu_custom_call.1} parent=0 // pred_check_branch
    %23 = sbr.rel (0) target = $region17
  $region16: #{tpu_custom_call.1} parent=0 // pred_region
    _
  $region17: #{tpu_custom_call.1} parent=0 // pred_fallthru
    _
  // Predicated region
  $region18: #{tpu_custom_call.1} parent=0 // pred_check
    _
  $region19: #{tpu_custom_call.1} parent=0 // pred_check_branch
    %25 = sbr.rel (0) target = $region21
  $region20: #{tpu_custom_call.1} parent=0 // pred_region
    _
  $region21: #{tpu_custom_call.1} parent=0 // pred_fallthru
    _
  // Predicated region
  $region22: #{tpu_custom_call.1} parent=0 // pred_check
    _
  $region23: #{tpu_custom_call.1} parent=0 // pred_check_branch
    %27 = sbr.rel (0) target = $region25
  $region24: #{tpu_custom_call.1} parent=0 // pred_region
    _
  $region25: #{tpu_custom_call.1} parent=0 // pred_fallthru
    _
  // Predicated region
  $region26: #{tpu_custom_call.1} parent=0 // pred_check
    _
  $region27: #{tpu_custom_call.1} parent=0 // pred_check_branch
    %29 = sbr.rel (0) target = $region29
  $region28: #{tpu_custom_call.1} parent=0 // pred_region
    _
  $region29: #{tpu_custom_call.1} parent=0 // pred_fallthru
    _
  // Predicated region
  $region30: #{tpu_custom_call.1} parent=0 // pred_check
    _
  $region31: #{tpu_custom_call.1} parent=0 // pred_check_branch
    %31 = sbr.rel (0) target = $region33
  $region32: #{tpu_custom_call.1} parent=0 // pred_region
    _
  $region33: #{tpu_custom_call.1} parent=0 // pred_fallthru
    _
  // Predicated region
  $region34: #{tpu_custom_call.1} parent=0 // pred_check
    _
  $region35: #{tpu_custom_call.1} parent=0 // pred_check_branch
    %33 = sbr.rel (0) target = $region37
  $region36: #{tpu_custom_call.1} parent=0 // pred_region
    _
  $region37: #{tpu_custom_call.1} parent=0 // pred_fallthru
    _
  %v34 = vld [vmem:[%s0] sm:$0xff]
  %v35 = vld [vmem:[%s0 + $0x8] sm:$0xff]
  %v36 = vld [vmem:[%s0 + $0x10] sm:$0xff]
  %v37 = vld [vmem:[%s0 + $0x18] sm:$0xff]
  %v38 = vld [vmem:[%s0 + $0x20] sm:$0xff]
  %v39 = vld [vmem:[%s0 + $0x28] sm:$0xff]
  %v40 = vld [vmem:[%s0 + $0x30] sm:$0xff]
  %v41 = vld [vmem:[%s0 + $0x38] sm:$0xff]
  %v42 = vld [vmem:[%s0 + $0x40] sm:$0xff]
  %v43 = vld [vmem:[%s0 + $0x48] sm:$0xff]
  %v44 = vld [vmem:[%s0 + $0x50] sm:$0xff]
  %v45 = vld [vmem:[%s0 + $0x58] sm:$0xff]
  %v46 = vld [vmem:[%s0 + $0x60] sm:$0xff]
  %v47 = vld [vmem:[%s0 + $0x68] sm:$0xff]
  %v48 = vld [vmem:[%s0 + $0x70] sm:$0xff]
  %v49 = vld [vmem:[%s0 + $0x78] sm:$0xff]
  %v50 = vld [vmem:[%s0 + $0x80] sm:$0xff]
  %v51 = vld [vmem:[%s0 + $0x88] sm:$0xff]
  %v52 = vld [vmem:[%s0 + $0x90] sm:$0xff]
  %v53 = vld [vmem:[%s0 + $0x98] sm:$0xff]
  %v54 = vld [vmem:[%s0 + $0xa0] sm:$0xff]
  %v55 = vld [vmem:[%s0 + $0xa8] sm:$0xff]
  %v56 = vld [vmem:[%s0 + $0xb0] sm:$0xff]
  %v57 = vld [vmem:[%s0 + $0xb8] sm:$0xff]
  %v58 = vld [vmem:[%s0 + $0xc0] sm:$0xff]
  %v59 = vld [vmem:[%s1] sm:$0xff]
  %v60 = vld [vmem:[%s1 + $0x8] sm:$0xff]
  %v61 = vld [vmem:[%s1 + $0x10] sm:$0xff]
  %v62 = vld [vmem:[%s1 + $0x18] sm:$0xff]
  %v63 = vld [vmem:[%s1 + $0x20] sm:$0x3]
  %vm64 = vcmask 277504
  %v66 = vsel %vm64, %v34, 0
  %v69 = vsel %vm64, %v35, 0
  %v72 = vsel %vm64, %v36, 0
  %v75 = vsel %vm64, %v37, 0
  %v78 = vsel %vm64, %v38, 0
  %v81 = vsel %vm64, %v39, 0
  %v84 = vsel %vm64, %v40, 0
  %v87 = vsel %vm64, %v41, 0
  %v90 = vsel %vm64, %v42, 0
  %v93 = vsel %vm64, %v43, 0
  %v96 = vsel %vm64, %v44, 0
  %v99 = vsel %vm64, %v45, 0
  %v102 = vsel %vm64, %v46, 0
  %v105 = vsel %vm64, %v47, 0
  %v108 = vsel %vm64, %v48, 0
  %v111 = vsel %vm64, %v49, 0
  %v114 = vsel %vm64, %v50, 0
  %v117 = vsel %vm64, %v51, 0
  %v120 = vsel %vm64, %v52, 0
  %v123 = vsel %vm64, %v53, 0
  %v126 = vsel %vm64, %v54, 0
  %v129 = vsel %vm64, %v55, 0
  %v132 = vsel %vm64, %v56, 0
  %v135 = vsel %vm64, %v57, 0
  %v138 = vsel %vm64, %v58, 0
  %vm140 = vcmask 1041408
  %v142 = vsel %vm140, %v63, 0
  %144 = vmatpush.msra.mxu0 0.0
  %145 = vmatpush.msra.mxu0 0.0
  %146 = vmatpush.msra.mxu0 0.0
  %147 = vmatpush.msra.mxu0 0.0
  %148 = vmatpush.msra.mxu0 0.0
  %149 = vmatpush.msra.mxu0 0.0
  %150 = vmatpush.msra.mxu0 0.0
  %151 = vmatpush.msra.mxu0 0.0
  %152 = vmatpush.msra.mxu0 0.0
  %153 = vmatpush.msra.mxu0 0.0
  %154 = vmatpush.msra.mxu0 0.0
  %155 = vmatpush.msra.mxu0 %v142
  %156 = vmatpush.msra.mxu0 %v62
  %157 = vmatpush.msra.mxu0 %v61
  %158 = vmatpush.msra.mxu0 %v60
  %159 = vmatpush.msra.mxu0 %v59
  %160 = vmatmul.f32.gmra.mxu0 %v66
  %v161 = vpop.f32.mrf.mxu0
  %v162 = vadd.f32 0.0, %v161
  %163 = vmatmul.f32.gmra.mxu0 %v69
  %v164 = vpop.f32.mrf.mxu0
  %v165 = vadd.f32 0.0, %v164
  %166 = vmatmul.f32.gmra.mxu0 %v72
  %v167 = vpop.f32.mrf.mxu0
  %v168 = vadd.f32 0.0, %v167
  %169 = vmatmul.f32.gmra.mxu0 %v75
  %v170 = vpop.f32.mrf.mxu0
  %v171 = vadd.f32 0.0, %v170
  %172 = vmatmul.f32.gmra.mxu0 %v78
  %v173 = vpop.f32.mrf.mxu0
  %v174 = vadd.f32 0.0, %v173
  %175 = vmatmul.f32.gmra.mxu0 %v81
  %v176 = vpop.f32.mrf.mxu0
  %v177 = vadd.f32 0.0, %v176
  %178 = vmatmul.f32.gmra.mxu0 %v84
  %v179 = vpop.f32.mrf.mxu0
  %v180 = vadd.f32 0.0, %v179
  %181 = vmatmul.f32.gmra.mxu0 %v87
  %v182 = vpop.f32.mrf.mxu0
  %v183 = vadd.f32 0.0, %v182
  %184 = vmatmul.f32.gmra.mxu0 %v90
  %v185 = vpop.f32.mrf.mxu0
  %v186 = vadd.f32 0.0, %v185
  %187 = vmatmul.f32.gmra.mxu0 %v93
  %v188 = vpop.f32.mrf.mxu0
  %v189 = vadd.f32 0.0, %v188
  %190 = vmatmul.f32.gmra.mxu0 %v96
  %v191 = vpop.f32.mrf.mxu0
  %v192 = vadd.f32 0.0, %v191
  %193 = vmatmul.f32.gmra.mxu0 %v99
  %v194 = vpop.f32.mrf.mxu0
  %v195 = vadd.f32 0.0, %v194
  %196 = vmatmul.f32.gmra.mxu0 %v102
  %v197 = vpop.f32.mrf.mxu0
  %v198 = vadd.f32 0.0, %v197
  %199 = vmatmul.f32.gmra.mxu0 %v105
  %v200 = vpop.f32.mrf.mxu0
  %v201 = vadd.f32 0.0, %v200
  %202 = vmatmul.f32.gmra.mxu0 %v108
  %v203 = vpop.f32.mrf.mxu0
  %v204 = vadd.f32 0.0, %v203
  %205 = vmatmul.f32.gmra.mxu0 %v111
  %v206 = vpop.f32.mrf.mxu0
  %v207 = vadd.f32 0.0, %v206
  %208 = vmatmul.f32.gmra.mxu0 %v114
  %v209 = vpop.f32.mrf.mxu0
  %v210 = vadd.f32 0.0, %v209
  %211 = vmatmul.f32.gmra.mxu0 %v117
  %v212 = vpop.f32.mrf.mxu0
  %v213 = vadd.f32 0.0, %v212
  %214 = vmatmul.f32.gmra.mxu0 %v120
  %v215 = vpop.f32.mrf.mxu0
  %v216 = vadd.f32 0.0, %v215
  %217 = vmatmul.f32.gmra.mxu0 %v123
  %v218 = vpop.f32.mrf.mxu0
  %v219 = vadd.f32 0.0, %v218
  %220 = vmatmul.f32.gmra.mxu0 %v126
  %v221 = vpop.f32.mrf.mxu0
  %v222 = vadd.f32 0.0, %v221
  %223 = vmatmul.f32.gmra.mxu0 %v129
  %v224 = vpop.f32.mrf.mxu0
  %v225 = vadd.f32 0.0, %v224
  %226 = vmatmul.f32.gmra.mxu0 %v132
  %v227 = vpop.f32.mrf.mxu0
  %v228 = vadd.f32 0.0, %v227
  %229 = vmatmul.f32.gmra.mxu0 %v135
  %v230 = vpop.f32.mrf.mxu0
  %v231 = vadd.f32 0.0, %v230
  %232 = vmatmul.f32.gmra.mxu0 %v138
  %v233 = vpop.f32.mrf.mxu0
  %v234 = vadd.f32 0.0, %v233
  %235 = vdwg.mxu0
  %v236 = vadd.f32 %v162, %v165
  %v237 = vadd.f32 %v236, %v168
  %v238 = vadd.f32 %v237, %v171
  %v239 = vadd.f32 %v238, %v174
  %v240 = vadd.f32 %v239, %v177
  %v241 = vadd.f32 %v240, %v180
  %v242 = vadd.f32 %v241, %v183
  %v243 = vadd.f32 %v242, %v186
  %v244 = vadd.f32 %v243, %v189
  %v245 = vadd.f32 %v244, %v192
  %v246 = vadd.f32 %v245, %v195
  %v247 = vadd.f32 %v246, %v198
  %v248 = vadd.f32 %v247, %v201
  %v249 = vadd.f32 %v248, %v204
  %v250 = vadd.f32 %v249, %v207
  %v251 = vadd.f32 %v250, %v210
  %v252 = vadd.f32 %v251, %v213
  %v253 = vadd.f32 %v252, %v216
  %v254 = vadd.f32 %v253, %v219
  %v255 = vadd.f32 %v254, %v222
  %v256 = vadd.f32 %v255, %v225
  %v257 = vadd.f32 %v256, %v228
  %v258 = vadd.f32 %v257, %v231
  %v259 = vadd.f32 %v258, %v234
  %v260 = vrot.slane %v259, 4
  %v261 = vadd.f32 %v259, %v260
  %v262 = vrot.slane %v261, 2
  %v263 = vadd.f32 %v261, %v262
  %v264 = vrot.slane %v263, 1
  %v265 = vadd.f32 %v263, %v264
  %v266 = vmul.f32 %v162, %v162
  %v267 = vmul.f32 %v165, %v165
  %v268 = vmul.f32 %v168, %v168
  %v269 = vmul.f32 %v171, %v171
  %v270 = vmul.f32 %v174, %v174
  %v271 = vmul.f32 %v177, %v177
  %v272 = vmul.f32 %v180, %v180
  %v273 = vmul.f32 %v183, %v183
  %v274 = vmul.f32 %v186, %v186
  %v275 = vmul.f32 %v189, %v189
  %v276 = vmul.f32 %v192, %v192
  %v277 = vmul.f32 %v195, %v195
  %v278 = vmul.f32 %v198, %v198
  %v279 = vmul.f32 %v201, %v201
  %v280 = vmul.f32 %v204, %v204
  %v281 = vmul.f32 %v207, %v207
  %v282 = vmul.f32 %v210, %v210
  %v283 = vmul.f32 %v213, %v213
  %v284 = vmul.f32 %v216, %v216
  %v285 = vmul.f32 %v219, %v219
  %v286 = vmul.f32 %v222, %v222
  %v287 = vmul.f32 %v225, %v225
  %v288 = vmul.f32 %v228, %v228
  %v289 = vmul.f32 %v231, %v231
  %v290 = vmul.f32 %v234, %v234
  %v291 = vadd.f32 %v266, %v267
  %v292 = vadd.f32 %v291, %v268
  %v293 = vadd.f32 %v292, %v269
  %v294 = vadd.f32 %v293, %v270
  %v295 = vadd.f32 %v294, %v271
  %v296 = vadd.f32 %v295, %v272
  %v297 = vadd.f32 %v296, %v273
  %v298 = vadd.f32 %v297, %v274
  %v299 = vadd.f32 %v298, %v275
  %v300 = vadd.f32 %v299, %v276
  %v301 = vadd.f32 %v300, %v277
  %v302 = vadd.f32 %v301, %v278
  %v303 = vadd.f32 %v302, %v279
  %v304 = vadd.f32 %v303, %v280
  %v305 = vadd.f32 %v304, %v281
  %v306 = vadd.f32 %v305, %v282
  %v307 = vadd.f32 %v306, %v283
  %v308 = vadd.f32 %v307, %v284
  %v309 = vadd.f32 %v308, %v285
  %v310 = vadd.f32 %v309, %v286
  %v311 = vadd.f32 %v310, %v287
  %v312 = vadd.f32 %v311, %v288
  %v313 = vadd.f32 %v312, %v289
  %v314 = vadd.f32 %v313, %v290
  %v315 = vrot.slane %v314, 4
  %v316 = vadd.f32 %v314, %v315
  %v317 = vrot.slane %v316, 2
  %v318 = vadd.f32 %v316, %v317
  %v319 = vrot.slane %v318, 1
  %v320 = vadd.f32 %v318, %v319
  %v321 = vld [vmem:[%s2] sm:$0x1]
  %v322 = vld [vmem:[%s3] sm:$0x1]
  %v323 = vmul.f32 %v265, 0.005
  %v324 = vmul.f32 %v320, 0.005
  %v325 = vmul.f32 %v323, %v323
  %v326 = vsub.f32 %v324, %v325
  %v327 = vmax.f32 %v326, 0.0
  %v328 = vadd.f32 %v327, 1e-05
  %v329 = vrsqrt.pop %v328
  %v330 = vmul.f32 %v329, %v328
  %v331 = vmul.f32 %v330, %v329
  %v332 = vmul.f32 0.5, %v331
  %v333 = vsub.f32 1.5, %v332
  %v334 = vmul.f32 %v329, %v333
  %vm335 = vweird.f32 %v328
  %vm336 = vweird.f32 %v329
  %vm337 = vmor %vm335, %vm336
  %v338 = vsel %vm337, %v329, %v334
  %v339 = vmul.f32 %v321, %v338
  %v340 = vmul.f32 %v323, %v339
  %v341 = vsub.f32 %v322, %v340
  %v343 = vperm.slane %v339, 0
  %v345 = vmul.f32 %v162, %v343
  %v346 = vmul.f32 %v165, %v343
  %v347 = vmul.f32 %v168, %v343
  %v348 = vmul.f32 %v171, %v343
  %v349 = vmul.f32 %v174, %v343
  %v350 = vmul.f32 %v177, %v343
  %v351 = vmul.f32 %v180, %v343
  %v352 = vmul.f32 %v183, %v343
  %v353 = vmul.f32 %v186, %v343
  %v354 = vmul.f32 %v189, %v343
  %v355 = vmul.f32 %v192, %v343
  %v356 = vmul.f32 %v195, %v343
  %v357 = vmul.f32 %v198, %v343
  %v358 = vmul.f32 %v201, %v343
  %v359 = vmul.f32 %v204, %v343
  %v360 = vmul.f32 %v207, %v343
  %v361 = vmul.f32 %v210, %v343
  %v362 = vmul.f32 %v213, %v343
  %v363 = vmul.f32 %v216, %v343
  %v364 = vmul.f32 %v219, %v343
  %v365 = vmul.f32 %v222, %v343
  %v366 = vmul.f32 %v225, %v343
  %v367 = vmul.f32 %v228, %v343
  %v368 = vmul.f32 %v231, %v343
  %v369 = vmul.f32 %v234, %v343
  %v371 = vperm.slane %v341, 0
  %v373 = vadd.f32 %v345, %v371
  %v374 = vadd.f32 %v346, %v371
  %v375 = vadd.f32 %v347, %v371
  %v376 = vadd.f32 %v348, %v371
  %v377 = vadd.f32 %v349, %v371
  %v378 = vadd.f32 %v350, %v371
  %v379 = vadd.f32 %v351, %v371
  %v380 = vadd.f32 %v352, %v371
  %v381 = vadd.f32 %v353, %v371
  %v382 = vadd.f32 %v354, %v371
  %v383 = vadd.f32 %v355, %v371
  %v384 = vadd.f32 %v356, %v371
  %v385 = vadd.f32 %v357, %v371
  %v386 = vadd.f32 %v358, %v371
  %v387 = vadd.f32 %v359, %v371
  %v388 = vadd.f32 %v360, %v371
  %v389 = vadd.f32 %v361, %v371
  %v390 = vadd.f32 %v362, %v371
  %v391 = vadd.f32 %v363, %v371
  %v392 = vadd.f32 %v364, %v371
  %v393 = vadd.f32 %v365, %v371
  %v394 = vadd.f32 %v366, %v371
  %v395 = vadd.f32 %v367, %v371
  %v396 = vadd.f32 %v368, %v371
  %v397 = vadd.f32 %v369, %v371
  %v398 = vmax.f32 %v373, 0.0
  %v399 = vmax.f32 %v374, 0.0
  %v400 = vmax.f32 %v375, 0.0
  %v401 = vmax.f32 %v376, 0.0
  %v402 = vmax.f32 %v377, 0.0
  %v403 = vmax.f32 %v378, 0.0
  %v404 = vmax.f32 %v379, 0.0
  %v405 = vmax.f32 %v380, 0.0
  %v406 = vmax.f32 %v381, 0.0
  %v407 = vmax.f32 %v382, 0.0
  %v408 = vmax.f32 %v383, 0.0
  %v409 = vmax.f32 %v384, 0.0
  %v410 = vmax.f32 %v385, 0.0
  %v411 = vmax.f32 %v386, 0.0
  %v412 = vmax.f32 %v387, 0.0
  %v413 = vmax.f32 %v388, 0.0
  %v414 = vmax.f32 %v389, 0.0
  %v415 = vmax.f32 %v390, 0.0
  %v416 = vmax.f32 %v391, 0.0
  %v417 = vmax.f32 %v392, 0.0
  %v418 = vmax.f32 %v393, 0.0
  %v419 = vmax.f32 %v394, 0.0
  %v420 = vmax.f32 %v395, 0.0
  %v421 = vmax.f32 %v396, 0.0
  %v422 = vmax.f32 %v397, 0.0
  %v423 = vld [vmem:[%s4] sm:$0xff]
  %v424 = vld [vmem:[%s4 + $0x8] sm:$0xff]
  %v425 = vld [vmem:[%s4 + $0x10] sm:$0xff]
  %v426 = vld [vmem:[%s4 + $0x18] sm:$0xff]
  %v427 = vld [vmem:[%s4 + $0x20] sm:$0xff]
  %v428 = vld [vmem:[%s4 + $0x28] sm:$0xff]
  %v429 = vld [vmem:[%s4 + $0x30] sm:$0xff]
  %v430 = vld [vmem:[%s4 + $0x38] sm:$0xff]
  %v431 = vld [vmem:[%s4 + $0x40] sm:$0xff]
  %v432 = vld [vmem:[%s4 + $0x48] sm:$0xff]
  %v433 = vld [vmem:[%s4 + $0x50] sm:$0xff]
  %v434 = vld [vmem:[%s4 + $0x58] sm:$0xff]
  %v435 = vld [vmem:[%s4 + $0x60] sm:$0xff]
  %v436 = vld [vmem:[%s4 + $0x68] sm:$0xff]
  %v437 = vld [vmem:[%s4 + $0x70] sm:$0xff]
  %v438 = vld [vmem:[%s4 + $0x78] sm:$0xff]
  %439 = vmatpush.msra.mxu0 %v438
  %440 = vmatpush.msra.mxu0 %v437
  %441 = vmatpush.msra.mxu0 %v436
  %442 = vmatpush.msra.mxu0 %v435
  %443 = vmatpush.msra.mxu0 %v434
  %444 = vmatpush.msra.mxu0 %v433
  %445 = vmatpush.msra.mxu0 %v432
  %446 = vmatpush.msra.mxu0 %v431
  %447 = vmatpush.msra.mxu0 %v430
  %448 = vmatpush.msra.mxu0 %v429
  %449 = vmatpush.msra.mxu0 %v428
  %450 = vmatpush.msra.mxu0 %v427
  %451 = vmatpush.msra.mxu0 %v426
  %452 = vmatpush.msra.mxu0 %v425
  %453 = vmatpush.msra.mxu0 %v424
  %454 = vmatpush.msra.mxu0 %v423
  %455 = vmatmul.f32.gmra.mxu0 %v398
  %v456 = vpop.f32.mrf.mxu0
  %v457 = vadd.f32 0.0, %v456
  %458 = vmatmul.f32.gmra.mxu0 %v399
  %v459 = vpop.f32.mrf.mxu0
  %v460 = vadd.f32 0.0, %v459
  %461 = vmatmul.f32.gmra.mxu0 %v400
  %v462 = vpop.f32.mrf.mxu0
  %v463 = vadd.f32 0.0, %v462
  %464 = vmatmul.f32.gmra.mxu0 %v401
  %v465 = vpop.f32.mrf.mxu0
  %v466 = vadd.f32 0.0, %v465
  %467 = vmatmul.f32.gmra.mxu0 %v402
  %v468 = vpop.f32.mrf.mxu0
  %v469 = vadd.f32 0.0, %v468
  %470 = vmatmul.f32.gmra.mxu0 %v403
  %v471 = vpop.f32.mrf.mxu0
  %v472 = vadd.f32 0.0, %v471
  %473 = vmatmul.f32.gmra.mxu0 %v404
  %v474 = vpop.f32.mrf.mxu0
  %v475 = vadd.f32 0.0, %v474
  %476 = vmatmul.f32.gmra.mxu0 %v405
  %v477 = vpop.f32.mrf.mxu0
  %v478 = vadd.f32 0.0, %v477
  %479 = vmatmul.f32.gmra.mxu0 %v406
  %v480 = vpop.f32.mrf.mxu0
  %v481 = vadd.f32 0.0, %v480
  %482 = vmatmul.f32.gmra.mxu0 %v407
  %v483 = vpop.f32.mrf.mxu0
  %v484 = vadd.f32 0.0, %v483
  %485 = vmatmul.f32.gmra.mxu0 %v408
  %v486 = vpop.f32.mrf.mxu0
  %v487 = vadd.f32 0.0, %v486
  %488 = vmatmul.f32.gmra.mxu0 %v409
  %v489 = vpop.f32.mrf.mxu0
  %v490 = vadd.f32 0.0, %v489
  %491 = vmatmul.f32.gmra.mxu0 %v410
  %v492 = vpop.f32.mrf.mxu0
  %v493 = vadd.f32 0.0, %v492
  %494 = vmatmul.f32.gmra.mxu0 %v411
  %v495 = vpop.f32.mrf.mxu0
  %v496 = vadd.f32 0.0, %v495
  %497 = vmatmul.f32.gmra.mxu0 %v412
  %v498 = vpop.f32.mrf.mxu0
  %v499 = vadd.f32 0.0, %v498
  %500 = vmatmul.f32.gmra.mxu0 %v413
  %v501 = vpop.f32.mrf.mxu0
  %v502 = vadd.f32 0.0, %v501
  %503 = vmatmul.f32.gmra.mxu0 %v414
  %v504 = vpop.f32.mrf.mxu0
  %v505 = vadd.f32 0.0, %v504
  %506 = vmatmul.f32.gmra.mxu0 %v415
  %v507 = vpop.f32.mrf.mxu0
  %v508 = vadd.f32 0.0, %v507
  %509 = vmatmul.f32.gmra.mxu0 %v416
  %v510 = vpop.f32.mrf.mxu0
  %v511 = vadd.f32 0.0, %v510
  %512 = vmatmul.f32.gmra.mxu0 %v417
  %v513 = vpop.f32.mrf.mxu0
  %v514 = vadd.f32 0.0, %v513
  %515 = vmatmul.f32.gmra.mxu0 %v418
  %v516 = vpop.f32.mrf.mxu0
  %v517 = vadd.f32 0.0, %v516
  %518 = vmatmul.f32.gmra.mxu0 %v419
  %v519 = vpop.f32.mrf.mxu0
  %v520 = vadd.f32 0.0, %v519
  %521 = vmatmul.f32.gmra.mxu0 %v420
  %v522 = vpop.f32.mrf.mxu0
  %v523 = vadd.f32 0.0, %v522
  %524 = vmatmul.f32.gmra.mxu0 %v421
  %v525 = vpop.f32.mrf.mxu0
  %v526 = vadd.f32 0.0, %v525
  %527 = vmatmul.f32.gmra.mxu0 %v422
  %v528 = vpop.f32.mrf.mxu0
  %v529 = vadd.f32 0.0, %v528
  %530 = vdwg.mxu0
  %vm531 = vcmask 523264
  %v532 = vsel %vm531, %v457, 0.0
  %v533 = vsel %vm531, %v460, 0.0
  %v534 = vadd.f32 %v532, %v533
  %v535 = vsel %vm531, %v463, 0.0
  %v536 = vadd.f32 %v534, %v535
  %v537 = vsel %vm531, %v466, 0.0
  %v538 = vadd.f32 %v536, %v537
  %v539 = vsel %vm531, %v469, 0.0
  %v540 = vadd.f32 %v538, %v539
  %v541 = vsel %vm531, %v472, 0.0
  %v542 = vadd.f32 %v540, %v541
  %v543 = vsel %vm531, %v475, 0.0
  %v544 = vadd.f32 %v542, %v543
  %v545 = vsel %vm531, %v478, 0.0
  %v546 = vadd.f32 %v544, %v545
  %v547 = vsel %vm531, %v481, 0.0
  %v548 = vadd.f32 %v546, %v547
  %v549 = vsel %vm531, %v484, 0.0
  %v550 = vadd.f32 %v548, %v549
  %v551 = vsel %vm531, %v487, 0.0
  %v552 = vadd.f32 %v550, %v551
  %v553 = vsel %vm531, %v490, 0.0
  %v554 = vadd.f32 %v552, %v553
  %v555 = vsel %vm531, %v493, 0.0
  %v556 = vadd.f32 %v554, %v555
  %v557 = vsel %vm531, %v496, 0.0
  %v558 = vadd.f32 %v556, %v557
  %v559 = vsel %vm531, %v499, 0.0
  %v560 = vadd.f32 %v558, %v559
  %v561 = vsel %vm531, %v502, 0.0
  %v562 = vadd.f32 %v560, %v561
  %v563 = vsel %vm531, %v505, 0.0
  %v564 = vadd.f32 %v562, %v563
  %v565 = vsel %vm531, %v508, 0.0
  %v566 = vadd.f32 %v564, %v565
  %v567 = vsel %vm531, %v511, 0.0
  %v568 = vadd.f32 %v566, %v567
  %v569 = vsel %vm531, %v514, 0.0
  %v570 = vadd.f32 %v568, %v569
  %v571 = vsel %vm531, %v517, 0.0
  %v572 = vadd.f32 %v570, %v571
  %v573 = vsel %vm531, %v520, 0.0
  %v574 = vadd.f32 %v572, %v573
  %v575 = vsel %vm531, %v523, 0.0
  %v576 = vadd.f32 %v574, %v575
  %v577 = vsel %vm531, %v526, 0.0
  %v578 = vadd.f32 %v576, %v577
  %v579 = vsel %vm531, %v529, 0.0
  %v580 = vadd.f32 %v578, %v579
  %v581 = vrot.slane %v580, 4
  %v582 = vadd.f32 %v580, %v581
  %v583 = vrot.slane %v582, 2
  %v584 = vadd.f32 %v582, %v583
  %v585 = vrot.slane %v584, 1
  %v586 = vadd.f32 %v584, %v585
  %v587 = vmul.f32 %v457, %v457
  %v588 = vmul.f32 %v460, %v460
  %v589 = vmul.f32 %v463, %v463
  %v590 = vmul.f32 %v466, %v466
  %v591 = vmul.f32 %v469, %v469
  %v592 = vmul.f32 %v472, %v472
  %v593 = vmul.f32 %v475, %v475
  %v594 = vmul.f32 %v478, %v478
  %v595 = vmul.f32 %v481, %v481
  %v596 = vmul.f32 %v484, %v484
  %v597 = vmul.f32 %v487, %v487
  %v598 = vmul.f32 %v490, %v490
  %v599 = vmul.f32 %v493, %v493
  %v600 = vmul.f32 %v496, %v496
  %v601 = vmul.f32 %v499, %v499
  %v602 = vmul.f32 %v502, %v502
  %v603 = vmul.f32 %v505, %v505
  %v604 = vmul.f32 %v508, %v508
  %v605 = vmul.f32 %v511, %v511
  %v606 = vmul.f32 %v514, %v514
  %v607 = vmul.f32 %v517, %v517
  %v608 = vmul.f32 %v520, %v520
  %v609 = vmul.f32 %v523, %v523
  %v610 = vmul.f32 %v526, %v526
  %v611 = vmul.f32 %v529, %v529
  %v612 = vsel %vm531, %v587, 0.0
  %v613 = vsel %vm531, %v588, 0.0
  %v614 = vadd.f32 %v612, %v613
  %v615 = vsel %vm531, %v589, 0.0
  %v616 = vadd.f32 %v614, %v615
  %v617 = vsel %vm531, %v590, 0.0
  %v618 = vadd.f32 %v616, %v617
  %v619 = vsel %vm531, %v591, 0.0
  %v620 = vadd.f32 %v618, %v619
  %v621 = vsel %vm531, %v592, 0.0
  %v622 = vadd.f32 %v620, %v621
  %v623 = vsel %vm531, %v593, 0.0
  %v624 = vadd.f32 %v622, %v623
  %v625 = vsel %vm531, %v594, 0.0
  %v626 = vadd.f32 %v624, %v625
  %v627 = vsel %vm531, %v595, 0.0
  %v628 = vadd.f32 %v626, %v627
  %v629 = vsel %vm531, %v596, 0.0
  %v630 = vadd.f32 %v628, %v629
  %v631 = vsel %vm531, %v597, 0.0
  %v632 = vadd.f32 %v630, %v631
  %v633 = vsel %vm531, %v598, 0.0
  %v634 = vadd.f32 %v632, %v633
  %v635 = vsel %vm531, %v599, 0.0
  %v636 = vadd.f32 %v634, %v635
  %v637 = vsel %vm531, %v600, 0.0
  %v638 = vadd.f32 %v636, %v637
  %v639 = vsel %vm531, %v601, 0.0
  %v640 = vadd.f32 %v638, %v639
  %v641 = vsel %vm531, %v602, 0.0
  %v642 = vadd.f32 %v640, %v641
  %v643 = vsel %vm531, %v603, 0.0
  %v644 = vadd.f32 %v642, %v643
  %v645 = vsel %vm531, %v604, 0.0
  %v646 = vadd.f32 %v644, %v645
  %v647 = vsel %vm531, %v605, 0.0
  %v648 = vadd.f32 %v646, %v647
  %v649 = vsel %vm531, %v606, 0.0
  %v650 = vadd.f32 %v648, %v649
  %v651 = vsel %vm531, %v607, 0.0
  %v652 = vadd.f32 %v650, %v651
  %v653 = vsel %vm531, %v608, 0.0
  %v654 = vadd.f32 %v652, %v653
  %v655 = vsel %vm531, %v609, 0.0
  %v656 = vadd.f32 %v654, %v655
  %v657 = vsel %vm531, %v610, 0.0
  %v658 = vadd.f32 %v656, %v657
  %v659 = vsel %vm531, %v611, 0.0
  %v660 = vadd.f32 %v658, %v659
  %v661 = vrot.slane %v660, 4
  %v662 = vadd.f32 %v660, %v661
  %v663 = vrot.slane %v662, 2
  %v664 = vadd.f32 %v662, %v663
  %v665 = vrot.slane %v664, 1
  %v666 = vadd.f32 %v664, %v665
  %v667 = vld [vmem:[%s5] sm:$0x1]
  %v668 = vld [vmem:[%s6] sm:$0x1]
  %v669 = vmul.f32 %v586, 0.005
  %v670 = vmul.f32 %v666, 0.005
  %v671 = vmul.f32 %v669, %v669
  %v672 = vsub.f32 %v670, %v671
  %v673 = vmax.f32 %v672, 0.0
  %v674 = vadd.f32 %v673, 1e-05
  %v675 = vrsqrt.pop %v674
  %v676 = vmul.f32 %v675, %v674
  %v677 = vmul.f32 %v676, %v675
  %v678 = vmul.f32 0.5, %v677
  %v679 = vsub.f32 1.5, %v678
  %v680 = vmul.f32 %v675, %v679
  %vm681 = vweird.f32 %v674
  %vm682 = vweird.f32 %v675
  %vm683 = vmor %vm681, %vm682
  %v684 = vsel %vm683, %v675, %v680
  %v685 = vmul.f32 %v667, %v684
  %v686 = vmul.f32 %v669, %v685
  %v687 = vsub.f32 %v668, %v686
  %v689 = vperm.slane %v685, 0
  %v691 = vmul.f32 %v457, %v689
  %v692 = vmul.f32 %v460, %v689
  %v693 = vmul.f32 %v463, %v689
  %v694 = vmul.f32 %v466, %v689
  %v695 = vmul.f32 %v469, %v689
  %v696 = vmul.f32 %v472, %v689
  %v697 = vmul.f32 %v475, %v689
  %v698 = vmul.f32 %v478, %v689
  %v699 = vmul.f32 %v481, %v689
  %v700 = vmul.f32 %v484, %v689
  %v701 = vmul.f32 %v487, %v689
  %v702 = vmul.f32 %v490, %v689
  %v703 = vmul.f32 %v493, %v689
  %v704 = vmul.f32 %v496, %v689
  %v705 = vmul.f32 %v499, %v689
  %v706 = vmul.f32 %v502, %v689
  %v707 = vmul.f32 %v505, %v689
  %v708 = vmul.f32 %v508, %v689
  %v709 = vmul.f32 %v511, %v689
  %v710 = vmul.f32 %v514, %v689
  %v711 = vmul.f32 %v517, %v689
  %v712 = vmul.f32 %v520, %v689
  %v713 = vmul.f32 %v523, %v689
  %v714 = vmul.f32 %v526, %v689
  %v715 = vmul.f32 %v529, %v689
  %v717 = vperm.slane %v687, 0
  %v719 = vadd.f32 %v691, %v717
  %v720 = vadd.f32 %v692, %v717
  %v721 = vadd.f32 %v693, %v717
  %v722 = vadd.f32 %v694, %v717
  %v723 = vadd.f32 %v695, %v717
  %v724 = vadd.f32 %v696, %v717
  %v725 = vadd.f32 %v697, %v717
  %v726 = vadd.f32 %v698, %v717
  %v727 = vadd.f32 %v699, %v717
  %v728 = vadd.f32 %v700, %v717
  %v729 = vadd.f32 %v701, %v717
  %v730 = vadd.f32 %v702, %v717
  %v731 = vadd.f32 %v703, %v717
  %v732 = vadd.f32 %v704, %v717
  %v733 = vadd.f32 %v705, %v717
  %v734 = vadd.f32 %v706, %v717
  %v735 = vadd.f32 %v707, %v717
  %v736 = vadd.f32 %v708, %v717
  %v737 = vadd.f32 %v709, %v717
  %v738 = vadd.f32 %v710, %v717
  %v739 = vadd.f32 %v711, %v717
  %v740 = vadd.f32 %v712, %v717
  %v741 = vadd.f32 %v713, %v717
  %v742 = vadd.f32 %v714, %v717
  %v743 = vadd.f32 %v715, %v717
  %v744 = vmax.f32 %v719, 0.0
  %v745 = vmax.f32 %v720, 0.0
  %v746 = vmax.f32 %v721, 0.0
  %v747 = vmax.f32 %v722, 0.0
  %v748 = vmax.f32 %v723, 0.0
  %v749 = vmax.f32 %v724, 0.0
  %v750 = vmax.f32 %v725, 0.0
  %v751 = vmax.f32 %v726, 0.0
  %v752 = vmax.f32 %v727, 0.0
  %v753 = vmax.f32 %v728, 0.0
  %v754 = vmax.f32 %v729, 0.0
  %v755 = vmax.f32 %v730, 0.0
  %v756 = vmax.f32 %v731, 0.0
  %v757 = vmax.f32 %v732, 0.0
  %v758 = vmax.f32 %v733, 0.0
  %v759 = vmax.f32 %v734, 0.0
  %v760 = vmax.f32 %v735, 0.0
  %v761 = vmax.f32 %v736, 0.0
  %v762 = vmax.f32 %v737, 0.0
  %v763 = vmax.f32 %v738, 0.0
  %v764 = vmax.f32 %v739, 0.0
  %v765 = vmax.f32 %v740, 0.0
  %v766 = vmax.f32 %v741, 0.0
  %v767 = vmax.f32 %v742, 0.0
  %v768 = vmax.f32 %v743, 0.0
  %v769 = vld [vmem:[%s7] sm:$0x1]
  %v771 = vperm.slane %v769, 0
  %v773 = vmul.f32 %v744, %v771
  %v774 = vmul.f32 %v745, %v771
  %v775 = vmul.f32 %v746, %v771
  %v776 = vmul.f32 %v747, %v771
  %v777 = vmul.f32 %v748, %v771
  %v778 = vmul.f32 %v749, %v771
  %v779 = vmul.f32 %v750, %v771
  %v780 = vmul.f32 %v751, %v771
  %v781 = vmul.f32 %v752, %v771
  %v782 = vmul.f32 %v753, %v771
  %v783 = vmul.f32 %v754, %v771
  %v784 = vmul.f32 %v755, %v771
  %v785 = vmul.f32 %v756, %v771
  %v786 = vmul.f32 %v757, %v771
  %v787 = vmul.f32 %v758, %v771
  %v788 = vmul.f32 %v759, %v771
  %v789 = vmul.f32 %v760, %v771
  %v790 = vmul.f32 %v761, %v771
  %v791 = vmul.f32 %v762, %v771
  %v792 = vmul.f32 %v763, %v771
  %v793 = vmul.f32 %v764, %v771
  %v794 = vmul.f32 %v765, %v771
  %v795 = vmul.f32 %v766, %v771
  %v796 = vmul.f32 %v767, %v771
  %v797 = vmul.f32 %v768, %v771
  %v798 = vsel %vm531, %v773, 0.0
  %799 = vadd.xlane.f32.xlu0 %v798
  %v800 = vpop.xlane.xlu0 %799
  %v801 = vsel %vm531, %v774, 0.0
  %802 = vadd.xlane.f32.xlu0 %v801
  %v803 = vpop.xlane.xlu0 %802
  %v804 = vsel %vm531, %v775, 0.0
  %805 = vadd.xlane.f32.xlu0 %v804
  %v806 = vpop.xlane.xlu0 %805
  %v807 = vsel %vm531, %v776, 0.0
  %808 = vadd.xlane.f32.xlu0 %v807
  %v809 = vpop.xlane.xlu0 %808
  %v810 = vsel %vm531, %v777, 0.0
  %811 = vadd.xlane.f32.xlu0 %v810
  %v812 = vpop.xlane.xlu0 %811
  %v813 = vsel %vm531, %v778, 0.0
  %814 = vadd.xlane.f32.xlu0 %v813
  %v815 = vpop.xlane.xlu0 %814
  %v816 = vsel %vm531, %v779, 0.0
  %817 = vadd.xlane.f32.xlu0 %v816
  %v818 = vpop.xlane.xlu0 %817
  %v819 = vsel %vm531, %v780, 0.0
  %820 = vadd.xlane.f32.xlu0 %v819
  %v821 = vpop.xlane.xlu0 %820
  %v822 = vsel %vm531, %v781, 0.0
  %823 = vadd.xlane.f32.xlu0 %v822
  %v824 = vpop.xlane.xlu0 %823
  %v825 = vsel %vm531, %v782, 0.0
  %826 = vadd.xlane.f32.xlu0 %v825
  %v827 = vpop.xlane.xlu0 %826
  %v828 = vsel %vm531, %v783, 0.0
  %829 = vadd.xlane.f32.xlu0 %v828
  %v830 = vpop.xlane.xlu0 %829
  %v831 = vsel %vm531, %v784, 0.0
  %832 = vadd.xlane.f32.xlu0 %v831
  %v833 = vpop.xlane.xlu0 %832
  %v834 = vsel %vm531, %v785, 0.0
  %835 = vadd.xlane.f32.xlu0 %v834
  %v836 = vpop.xlane.xlu0 %835
  %v837 = vsel %vm531, %v786, 0.0
  %838 = vadd.xlane.f32.xlu0 %v837
  %v839 = vpop.xlane.xlu0 %838
  %v840 = vsel %vm531, %v787, 0.0
  %841 = vadd.xlane.f32.xlu0 %v840
  %v842 = vpop.xlane.xlu0 %841
  %v843 = vsel %vm531, %v788, 0.0
  %844 = vadd.xlane.f32.xlu0 %v843
  %v845 = vpop.xlane.xlu0 %844
  %v846 = vsel %vm531, %v789, 0.0
  %847 = vadd.xlane.f32.xlu0 %v846
  %v848 = vpop.xlane.xlu0 %847
  %v849 = vsel %vm531, %v790, 0.0
  %850 = vadd.xlane.f32.xlu0 %v849
  %v851 = vpop.xlane.xlu0 %850
  %v852 = vsel %vm531, %v791, 0.0
  %853 = vadd.xlane.f32.xlu0 %v852
  %v854 = vpop.xlane.xlu0 %853
  %v855 = vsel %vm531, %v792, 0.0
  %856 = vadd.xlane.f32.xlu0 %v855
  %v857 = vpop.xlane.xlu0 %856
  %v858 = vsel %vm531, %v793, 0.0
  %859 = vadd.xlane.f32.xlu0 %v858
  %v860 = vpop.xlane.xlu0 %859
  %v861 = vsel %vm531, %v794, 0.0
  %862 = vadd.xlane.f32.xlu0 %v861
  %v863 = vpop.xlane.xlu0 %862
  %v864 = vsel %vm531, %v795, 0.0
  %865 = vadd.xlane.f32.xlu0 %v864
  %v866 = vpop.xlane.xlu0 %865
  %v867 = vsel %vm531, %v796, 0.0
  %868 = vadd.xlane.f32.xlu0 %v867
  %v869 = vpop.xlane.xlu0 %868
  %v870 = vsel %vm531, %v797, 0.0
  %871 = vadd.xlane.f32.xlu0 %v870
  %v872 = vpop.xlane.xlu0 %871
  %v873 = vld [vmem:[#allocation2] sm:$0x1]
  %v875 = vperm.slane %v873, 0
  %v877 = vadd.f32 %v800, %v875
  %v878 = vadd.f32 %v803, %v875
  %v879 = vadd.f32 %v806, %v875
  %v880 = vadd.f32 %v809, %v875
  %v881 = vadd.f32 %v812, %v875
  %v882 = vadd.f32 %v815, %v875
  %v883 = vadd.f32 %v818, %v875
  %v884 = vadd.f32 %v821, %v875
  %v885 = vadd.f32 %v824, %v875
  %v886 = vadd.f32 %v827, %v875
  %v887 = vadd.f32 %v830, %v875
  %v888 = vadd.f32 %v833, %v875
  %v889 = vadd.f32 %v836, %v875
  %v890 = vadd.f32 %v839, %v875
  %v891 = vadd.f32 %v842, %v875
  %v892 = vadd.f32 %v845, %v875
  %v893 = vadd.f32 %v848, %v875
  %v894 = vadd.f32 %v851, %v875
  %v895 = vadd.f32 %v854, %v875
  %v896 = vadd.f32 %v857, %v875
  %v897 = vadd.f32 %v860, %v875
  %v898 = vadd.f32 %v863, %v875
  %v899 = vadd.f32 %v866, %v875
  %v900 = vadd.f32 %v869, %v875
  %v901 = vadd.f32 %v872, %v875
  %v902 = vxor.u32 %v877, 2147483648
  %v903 = vxor.u32 %v878, 2147483648
  %v904 = vxor.u32 %v879, 2147483648
  %v905 = vxor.u32 %v880, 2147483648
  %v906 = vxor.u32 %v881, 2147483648
  %v907 = vxor.u32 %v882, 2147483648
  %v908 = vxor.u32 %v883, 2147483648
  %v909 = vxor.u32 %v884, 2147483648
  %v910 = vxor.u32 %v885, 2147483648
  %v911 = vxor.u32 %v886, 2147483648
  %v912 = vxor.u32 %v887, 2147483648
  %v913 = vxor.u32 %v888, 2147483648
  %v914 = vxor.u32 %v889, 2147483648
  %v915 = vxor.u32 %v890, 2147483648
  %v916 = vxor.u32 %v891, 2147483648
  %v917 = vxor.u32 %v892, 2147483648
  %v918 = vxor.u32 %v893, 2147483648
  %v919 = vxor.u32 %v894, 2147483648
  %v920 = vxor.u32 %v895, 2147483648
  %v921 = vxor.u32 %v896, 2147483648
  %v922 = vxor.u32 %v897, 2147483648
  %v923 = vxor.u32 %v898, 2147483648
  %v924 = vxor.u32 %v899, 2147483648
  %v925 = vxor.u32 %v900, 2147483648
  %v926 = vxor.u32 %v901, 2147483648
  %v927 = vmul.f32 %v902, 1.442695
  %v928 = vpow.pop %v927
  %v929 = vmul.f32 %v903, 1.442695
  %v930 = vpow.pop %v929
  %v931 = vmul.f32 %v904, 1.442695
  %v932 = vpow.pop %v931
  %v933 = vmul.f32 %v905, 1.442695
  %v934 = vpow.pop %v933
  %v935 = vmul.f32 %v906, 1.442695
  %v936 = vpow.pop %v935
  %v937 = vmul.f32 %v907, 1.442695
  %v938 = vpow.pop %v937
  %v939 = vmul.f32 %v908, 1.442695
  %v940 = vpow.pop %v939
  %v941 = vmul.f32 %v909, 1.442695
  %v942 = vpow.pop %v941
  %v943 = vmul.f32 %v910, 1.442695
  %v944 = vpow.pop %v943
  %v945 = vmul.f32 %v911, 1.442695
  %v946 = vpow.pop %v945
  %v947 = vmul.f32 %v912, 1.442695
  %v948 = vpow.pop %v947
  %v949 = vmul.f32 %v913, 1.442695
  %v950 = vpow.pop %v949
  %v951 = vmul.f32 %v914, 1.442695
  %v952 = vpow.pop %v951
  %v953 = vmul.f32 %v915, 1.442695
  %v954 = vpow.pop %v953
  %v955 = vmul.f32 %v916, 1.442695
  %v956 = vpow.pop %v955
  %v957 = vmul.f32 %v917, 1.442695
  %v958 = vpow.pop %v957
  %v959 = vmul.f32 %v918, 1.442695
  %v960 = vpow.pop %v959
  %v961 = vmul.f32 %v919, 1.442695
  %v962 = vpow.pop %v961
  %v963 = vmul.f32 %v920, 1.442695
  %v964 = vpow.pop %v963
  %v965 = vmul.f32 %v921, 1.442695
  %v966 = vpow.pop %v965
  %v967 = vmul.f32 %v922, 1.442695
  %v968 = vpow.pop %v967
  %v969 = vmul.f32 %v923, 1.442695
  %v970 = vpow.pop %v969
  %v971 = vmul.f32 %v924, 1.442695
  %v972 = vpow.pop %v971
  %v973 = vmul.f32 %v925, 1.442695
  %v974 = vpow.pop %v973
  %v975 = vmul.f32 %v926, 1.442695
  %v976 = vpow.pop %v975
  %v977 = vadd.f32 %v928, 1.0
  %v978 = vadd.f32 %v930, 1.0
  %v979 = vadd.f32 %v932, 1.0
  %v980 = vadd.f32 %v934, 1.0
  %v981 = vadd.f32 %v936, 1.0
  %v982 = vadd.f32 %v938, 1.0
  %v983 = vadd.f32 %v940, 1.0
  %v984 = vadd.f32 %v942, 1.0
  %v985 = vadd.f32 %v944, 1.0
  %v986 = vadd.f32 %v946, 1.0
  %v987 = vadd.f32 %v948, 1.0
  %v988 = vadd.f32 %v950, 1.0
  %v989 = vadd.f32 %v952, 1.0
  %v990 = vadd.f32 %v954, 1.0
  %v991 = vadd.f32 %v956, 1.0
  %v992 = vadd.f32 %v958, 1.0
  %v993 = vadd.f32 %v960, 1.0
  %v994 = vadd.f32 %v962, 1.0
  %v995 = vadd.f32 %v964, 1.0
  %v996 = vadd.f32 %v966, 1.0
  %v997 = vadd.f32 %v968, 1.0
  %v998 = vadd.f32 %v970, 1.0
  %v999 = vadd.f32 %v972, 1.0
  %v1000 = vadd.f32 %v974, 1.0
  %v1001 = vadd.f32 %v976, 1.0
  %v1002 = vrcp.pop %v977
  %v1003 = vmul.f32 %v977, %v1002
  %v1004 = vsub.f32 1.0, %v1003
  %v1005 = vmul.f32 %v1002, %v1004
  %v1006 = vadd.f32 %v1002, %v1005
  %vm1007 = vweird.f32 %v977
  %vm1008 = vweird.f32 %v1002
  %vm1009 = vmor %vm1007, %vm1008
  %v1010 = vsel %vm1009, %v1002, %v1006
  %v1011 = vand.u32 2147483647, %v977
  %vm1012 = vcmp.eq.f32.partialorder %v1011, 8.507059e+37
  %v1013 = vand.u32 %v977, 2147483648
  %v1014 = vor.u32 1.1754944e-38, %v1013
  %v1015 = vsel %vm1012, %v1014, %v1010
  %v1016 = vmul.f32 1.0, %v1015
  %v1017 = vrcp.pop %v978
  %v1018 = vmul.f32 %v978, %v1017
  %v1019 = vsub.f32 1.0, %v1018
  %v1020 = vmul.f32 %v1017, %v1019
  %v1021 = vadd.f32 %v1017, %v1020
  %vm1022 = vweird.f32 %v978
  %vm1023 = vweird.f32 %v1017
  %vm1024 = vmor %vm1022, %vm1023
  %v1025 = vsel %vm1024, %v1017, %v1021
  %v1026 = vand.u32 2147483647, %v978
  %vm1027 = vcmp.eq.f32.partialorder %v1026, 8.507059e+37
  %v1028 = vand.u32 %v978, 2147483648
  %v1029 = vor.u32 1.1754944e-38, %v1028
  %v1030 = vsel %vm1027, %v1029, %v1025
  %v1031 = vmul.f32 1.0, %v1030
  %v1032 = vrcp.pop %v979
  %v1033 = vmul.f32 %v979, %v1032
  %v1034 = vsub.f32 1.0, %v1033
  %v1035 = vmul.f32 %v1032, %v1034
  %v1036 = vadd.f32 %v1032, %v1035
  %vm1037 = vweird.f32 %v979
  %vm1038 = vweird.f32 %v1032
  %vm1039 = vmor %vm1037, %vm1038
  %v1040 = vsel %vm1039, %v1032, %v1036
  %v1041 = vand.u32 2147483647, %v979
  %vm1042 = vcmp.eq.f32.partialorder %v1041, 8.507059e+37
  %v1043 = vand.u32 %v979, 2147483648
  %v1044 = vor.u32 1.1754944e-38, %v1043
  %v1045 = vsel %vm1042, %v1044, %v1040
  %v1046 = vmul.f32 1.0, %v1045
  %v1047 = vrcp.pop %v980
  %v1048 = vmul.f32 %v980, %v1047
  %v1049 = vsub.f32 1.0, %v1048
  %v1050 = vmul.f32 %v1047, %v1049
  %v1051 = vadd.f32 %v1047, %v1050
  %vm1052 = vweird.f32 %v980
  %vm1053 = vweird.f32 %v1047
  %vm1054 = vmor %vm1052, %vm1053
  %v1055 = vsel %vm1054, %v1047, %v1051
  %v1056 = vand.u32 2147483647, %v980
  %vm1057 = vcmp.eq.f32.partialorder %v1056, 8.507059e+37
  %v1058 = vand.u32 %v980, 2147483648
  %v1059 = vor.u32 1.1754944e-38, %v1058
  %v1060 = vsel %vm1057, %v1059, %v1055
  %v1061 = vmul.f32 1.0, %v1060
  %v1062 = vrcp.pop %v981
  %v1063 = vmul.f32 %v981, %v1062
  %v1064 = vsub.f32 1.0, %v1063
  %v1065 = vmul.f32 %v1062, %v1064
  %v1066 = vadd.f32 %v1062, %v1065
  %vm1067 = vweird.f32 %v981
  %vm1068 = vweird.f32 %v1062
  %vm1069 = vmor %vm1067, %vm1068
  %v1070 = vsel %vm1069, %v1062, %v1066
  %v1071 = vand.u32 2147483647, %v981
  %vm1072 = vcmp.eq.f32.partialorder %v1071, 8.507059e+37
  %v1073 = vand.u32 %v981, 2147483648
  %v1074 = vor.u32 1.1754944e-38, %v1073
  %v1075 = vsel %vm1072, %v1074, %v1070
  %v1076 = vmul.f32 1.0, %v1075
  %v1077 = vrcp.pop %v982
  %v1078 = vmul.f32 %v982, %v1077
  %v1079 = vsub.f32 1.0, %v1078
  %v1080 = vmul.f32 %v1077, %v1079
  %v1081 = vadd.f32 %v1077, %v1080
  %vm1082 = vweird.f32 %v982
  %vm1083 = vweird.f32 %v1077
  %vm1084 = vmor %vm1082, %vm1083
  %v1085 = vsel %vm1084, %v1077, %v1081
  %v1086 = vand.u32 2147483647, %v982
  %vm1087 = vcmp.eq.f32.partialorder %v1086, 8.507059e+37
  %v1088 = vand.u32 %v982, 2147483648
  %v1089 = vor.u32 1.1754944e-38, %v1088
  %v1090 = vsel %vm1087, %v1089, %v1085
  %v1091 = vmul.f32 1.0, %v1090
  %v1092 = vrcp.pop %v983
  %v1093 = vmul.f32 %v983, %v1092
  %v1094 = vsub.f32 1.0, %v1093
  %v1095 = vmul.f32 %v1092, %v1094
  %v1096 = vadd.f32 %v1092, %v1095
  %vm1097 = vweird.f32 %v983
  %vm1098 = vweird.f32 %v1092
  %vm1099 = vmor %vm1097, %vm1098
  %v1100 = vsel %vm1099, %v1092, %v1096
  %v1101 = vand.u32 2147483647, %v983
  %vm1102 = vcmp.eq.f32.partialorder %v1101, 8.507059e+37
  %v1103 = vand.u32 %v983, 2147483648
  %v1104 = vor.u32 1.1754944e-38, %v1103
  %v1105 = vsel %vm1102, %v1104, %v1100
  %v1106 = vmul.f32 1.0, %v1105
  %v1107 = vrcp.pop %v984
  %v1108 = vmul.f32 %v984, %v1107
  %v1109 = vsub.f32 1.0, %v1108
  %v1110 = vmul.f32 %v1107, %v1109
  %v1111 = vadd.f32 %v1107, %v1110
  %vm1112 = vweird.f32 %v984
  %vm1113 = vweird.f32 %v1107
  %vm1114 = vmor %vm1112, %vm1113
  %v1115 = vsel %vm1114, %v1107, %v1111
  %v1116 = vand.u32 2147483647, %v984
  %vm1117 = vcmp.eq.f32.partialorder %v1116, 8.507059e+37
  %v1118 = vand.u32 %v984, 2147483648
  %v1119 = vor.u32 1.1754944e-38, %v1118
  %v1120 = vsel %vm1117, %v1119, %v1115
  %v1121 = vmul.f32 1.0, %v1120
  %v1122 = vrcp.pop %v985
  %v1123 = vmul.f32 %v985, %v1122
  %v1124 = vsub.f32 1.0, %v1123
  %v1125 = vmul.f32 %v1122, %v1124
  %v1126 = vadd.f32 %v1122, %v1125
  %vm1127 = vweird.f32 %v985
  %vm1128 = vweird.f32 %v1122
  %vm1129 = vmor %vm1127, %vm1128
  %v1130 = vsel %vm1129, %v1122, %v1126
  %v1131 = vand.u32 2147483647, %v985
  %vm1132 = vcmp.eq.f32.partialorder %v1131, 8.507059e+37
  %v1133 = vand.u32 %v985, 2147483648
  %v1134 = vor.u32 1.1754944e-38, %v1133
  %v1135 = vsel %vm1132, %v1134, %v1130
  %v1136 = vmul.f32 1.0, %v1135
  %v1137 = vrcp.pop %v986
  %v1138 = vmul.f32 %v986, %v1137
  %v1139 = vsub.f32 1.0, %v1138
  %v1140 = vmul.f32 %v1137, %v1139
  %v1141 = vadd.f32 %v1137, %v1140
  %vm1142 = vweird.f32 %v986
  %vm1143 = vweird.f32 %v1137
  %vm1144 = vmor %vm1142, %vm1143
  %v1145 = vsel %vm1144, %v1137, %v1141
  %v1146 = vand.u32 2147483647, %v986
  %vm1147 = vcmp.eq.f32.partialorder %v1146, 8.507059e+37
  %v1148 = vand.u32 %v986, 2147483648
  %v1149 = vor.u32 1.1754944e-38, %v1148
  %v1150 = vsel %vm1147, %v1149, %v1145
  %v1151 = vmul.f32 1.0, %v1150
  %v1152 = vrcp.pop %v987
  %v1153 = vmul.f32 %v987, %v1152
  %v1154 = vsub.f32 1.0, %v1153
  %v1155 = vmul.f32 %v1152, %v1154
  %v1156 = vadd.f32 %v1152, %v1155
  %vm1157 = vweird.f32 %v987
  %vm1158 = vweird.f32 %v1152
  %vm1159 = vmor %vm1157, %vm1158
  %v1160 = vsel %vm1159, %v1152, %v1156
  %v1161 = vand.u32 2147483647, %v987
  %vm1162 = vcmp.eq.f32.partialorder %v1161, 8.507059e+37
  %v1163 = vand.u32 %v987, 2147483648
  %v1164 = vor.u32 1.1754944e-38, %v1163
  %v1165 = vsel %vm1162, %v1164, %v1160
  %v1166 = vmul.f32 1.0, %v1165
  %v1167 = vrcp.pop %v988
  %v1168 = vmul.f32 %v988, %v1167
  %v1169 = vsub.f32 1.0, %v1168
  %v1170 = vmul.f32 %v1167, %v1169
  %v1171 = vadd.f32 %v1167, %v1170
  %vm1172 = vweird.f32 %v988
  %vm1173 = vweird.f32 %v1167
  %vm1174 = vmor %vm1172, %vm1173
  %v1175 = vsel %vm1174, %v1167, %v1171
  %v1176 = vand.u32 2147483647, %v988
  %vm1177 = vcmp.eq.f32.partialorder %v1176, 8.507059e+37
  %v1178 = vand.u32 %v988, 2147483648
  %v1179 = vor.u32 1.1754944e-38, %v1178
  %v1180 = vsel %vm1177, %v1179, %v1175
  %v1181 = vmul.f32 1.0, %v1180
  %v1182 = vrcp.pop %v989
  %v1183 = vmul.f32 %v989, %v1182
  %v1184 = vsub.f32 1.0, %v1183
  %v1185 = vmul.f32 %v1182, %v1184
  %v1186 = vadd.f32 %v1182, %v1185
  %vm1187 = vweird.f32 %v989
  %vm1188 = vweird.f32 %v1182
  %vm1189 = vmor %vm1187, %vm1188
  %v1190 = vsel %vm1189, %v1182, %v1186
  %v1191 = vand.u32 2147483647, %v989
  %vm1192 = vcmp.eq.f32.partialorder %v1191, 8.507059e+37
  %v1193 = vand.u32 %v989, 2147483648
  %v1194 = vor.u32 1.1754944e-38, %v1193
  %v1195 = vsel %vm1192, %v1194, %v1190
  %v1196 = vmul.f32 1.0, %v1195
  %v1197 = vrcp.pop %v990
  %v1198 = vmul.f32 %v990, %v1197
  %v1199 = vsub.f32 1.0, %v1198
  %v1200 = vmul.f32 %v1197, %v1199
  %v1201 = vadd.f32 %v1197, %v1200
  %vm1202 = vweird.f32 %v990
  %vm1203 = vweird.f32 %v1197
  %vm1204 = vmor %vm1202, %vm1203
  %v1205 = vsel %vm1204, %v1197, %v1201
  %v1206 = vand.u32 2147483647, %v990
  %vm1207 = vcmp.eq.f32.partialorder %v1206, 8.507059e+37
  %v1208 = vand.u32 %v990, 2147483648
  %v1209 = vor.u32 1.1754944e-38, %v1208
  %v1210 = vsel %vm1207, %v1209, %v1205
  %v1211 = vmul.f32 1.0, %v1210
  %v1212 = vrcp.pop %v991
  %v1213 = vmul.f32 %v991, %v1212
  %v1214 = vsub.f32 1.0, %v1213
  %v1215 = vmul.f32 %v1212, %v1214
  %v1216 = vadd.f32 %v1212, %v1215
  %vm1217 = vweird.f32 %v991
  %vm1218 = vweird.f32 %v1212
  %vm1219 = vmor %vm1217, %vm1218
  %v1220 = vsel %vm1219, %v1212, %v1216
  %v1221 = vand.u32 2147483647, %v991
  %vm1222 = vcmp.eq.f32.partialorder %v1221, 8.507059e+37
  %v1223 = vand.u32 %v991, 2147483648
  %v1224 = vor.u32 1.1754944e-38, %v1223
  %v1225 = vsel %vm1222, %v1224, %v1220
  %v1226 = vmul.f32 1.0, %v1225
  %v1227 = vrcp.pop %v992
  %v1228 = vmul.f32 %v992, %v1227
  %v1229 = vsub.f32 1.0, %v1228
  %v1230 = vmul.f32 %v1227, %v1229
  %v1231 = vadd.f32 %v1227, %v1230
  %vm1232 = vweird.f32 %v992
  %vm1233 = vweird.f32 %v1227
  %vm1234 = vmor %vm1232, %vm1233
  %v1235 = vsel %vm1234, %v1227, %v1231
  %v1236 = vand.u32 2147483647, %v992
  %vm1237 = vcmp.eq.f32.partialorder %v1236, 8.507059e+37
  %v1238 = vand.u32 %v992, 2147483648
  %v1239 = vor.u32 1.1754944e-38, %v1238
  %v1240 = vsel %vm1237, %v1239, %v1235
  %v1241 = vmul.f32 1.0, %v1240
  %v1242 = vrcp.pop %v993
  %v1243 = vmul.f32 %v993, %v1242
  %v1244 = vsub.f32 1.0, %v1243
  %v1245 = vmul.f32 %v1242, %v1244
  %v1246 = vadd.f32 %v1242, %v1245
  %vm1247 = vweird.f32 %v993
  %vm1248 = vweird.f32 %v1242
  %vm1249 = vmor %vm1247, %vm1248
  %v1250 = vsel %vm1249, %v1242, %v1246
  %v1251 = vand.u32 2147483647, %v993
  %vm1252 = vcmp.eq.f32.partialorder %v1251, 8.507059e+37
  %v1253 = vand.u32 %v993, 2147483648
  %v1254 = vor.u32 1.1754944e-38, %v1253
  %v1255 = vsel %vm1252, %v1254, %v1250
  %v1256 = vmul.f32 1.0, %v1255
  %v1257 = vrcp.pop %v994
  %v1258 = vmul.f32 %v994, %v1257
  %v1259 = vsub.f32 1.0, %v1258
  %v1260 = vmul.f32 %v1257, %v1259
  %v1261 = vadd.f32 %v1257, %v1260
  %vm1262 = vweird.f32 %v994
  %vm1263 = vweird.f32 %v1257
  %vm1264 = vmor %vm1262, %vm1263
  %v1265 = vsel %vm1264, %v1257, %v1261
  %v1266 = vand.u32 2147483647, %v994
  %vm1267 = vcmp.eq.f32.partialorder %v1266, 8.507059e+37
  %v1268 = vand.u32 %v994, 2147483648
  %v1269 = vor.u32 1.1754944e-38, %v1268
  %v1270 = vsel %vm1267, %v1269, %v1265
  %v1271 = vmul.f32 1.0, %v1270
  %v1272 = vrcp.pop %v995
  %v1273 = vmul.f32 %v995, %v1272
  %v1274 = vsub.f32 1.0, %v1273
  %v1275 = vmul.f32 %v1272, %v1274
  %v1276 = vadd.f32 %v1272, %v1275
  %vm1277 = vweird.f32 %v995
  %vm1278 = vweird.f32 %v1272
  %vm1279 = vmor %vm1277, %vm1278
  %v1280 = vsel %vm1279, %v1272, %v1276
  %v1281 = vand.u32 2147483647, %v995
  %vm1282 = vcmp.eq.f32.partialorder %v1281, 8.507059e+37
  %v1283 = vand.u32 %v995, 2147483648
  %v1284 = vor.u32 1.1754944e-38, %v1283
  %v1285 = vsel %vm1282, %v1284, %v1280
  %v1286 = vmul.f32 1.0, %v1285
  %v1287 = vrcp.pop %v996
  %v1288 = vmul.f32 %v996, %v1287
  %v1289 = vsub.f32 1.0, %v1288
  %v1290 = vmul.f32 %v1287, %v1289
  %v1291 = vadd.f32 %v1287, %v1290
  %vm1292 = vweird.f32 %v996
  %vm1293 = vweird.f32 %v1287
  %vm1294 = vmor %vm1292, %vm1293
  %v1295 = vsel %vm1294, %v1287, %v1291
  %v1296 = vand.u32 2147483647, %v996
  %vm1297 = vcmp.eq.f32.partialorder %v1296, 8.507059e+37
  %v1298 = vand.u32 %v996, 2147483648
  %v1299 = vor.u32 1.1754944e-38, %v1298
  %v1300 = vsel %vm1297, %v1299, %v1295
  %v1301 = vmul.f32 1.0, %v1300
  %v1302 = vrcp.pop %v997
  %v1303 = vmul.f32 %v997, %v1302
  %v1304 = vsub.f32 1.0, %v1303
  %v1305 = vmul.f32 %v1302, %v1304
  %v1306 = vadd.f32 %v1302, %v1305
  %vm1307 = vweird.f32 %v997
  %vm1308 = vweird.f32 %v1302
  %vm1309 = vmor %vm1307, %vm1308
  %v1310 = vsel %vm1309, %v1302, %v1306
  %v1311 = vand.u32 2147483647, %v997
  %vm1312 = vcmp.eq.f32.partialorder %v1311, 8.507059e+37
  %v1313 = vand.u32 %v997, 2147483648
  %v1314 = vor.u32 1.1754944e-38, %v1313
  %v1315 = vsel %vm1312, %v1314, %v1310
  %v1316 = vmul.f32 1.0, %v1315
  %v1317 = vrcp.pop %v998
  %v1318 = vmul.f32 %v998, %v1317
  %v1319 = vsub.f32 1.0, %v1318
  %v1320 = vmul.f32 %v1317, %v1319
  %v1321 = vadd.f32 %v1317, %v1320
  %vm1322 = vweird.f32 %v998
  %vm1323 = vweird.f32 %v1317
  %vm1324 = vmor %vm1322, %vm1323
  %v1325 = vsel %vm1324, %v1317, %v1321
  %v1326 = vand.u32 2147483647, %v998
  %vm1327 = vcmp.eq.f32.partialorder %v1326, 8.507059e+37
  %v1328 = vand.u32 %v998, 2147483648
  %v1329 = vor.u32 1.1754944e-38, %v1328
  %v1330 = vsel %vm1327, %v1329, %v1325
  %v1331 = vmul.f32 1.0, %v1330
  %v1332 = vrcp.pop %v999
  %v1333 = vmul.f32 %v999, %v1332
  %v1334 = vsub.f32 1.0, %v1333
  %v1335 = vmul.f32 %v1332, %v1334
  %v1336 = vadd.f32 %v1332, %v1335
  %vm1337 = vweird.f32 %v999
  %vm1338 = vweird.f32 %v1332
  %vm1339 = vmor %vm1337, %vm1338
  %v1340 = vsel %vm1339, %v1332, %v1336
  %v1341 = vand.u32 2147483647, %v999
  %vm1342 = vcmp.eq.f32.partialorder %v1341, 8.507059e+37
  %v1343 = vand.u32 %v999, 2147483648
  %v1344 = vor.u32 1.1754944e-38, %v1343
  %v1345 = vsel %vm1342, %v1344, %v1340
  %v1346 = vmul.f32 1.0, %v1345
  %v1347 = vrcp.pop %v1000
  %v1348 = vmul.f32 %v1000, %v1347
  %v1349 = vsub.f32 1.0, %v1348
  %v1350 = vmul.f32 %v1347, %v1349
  %v1351 = vadd.f32 %v1347, %v1350
  %vm1352 = vweird.f32 %v1000
  %vm1353 = vweird.f32 %v1347
  %vm1354 = vmor %vm1352, %vm1353
  %v1355 = vsel %vm1354, %v1347, %v1351
  %v1356 = vand.u32 2147483647, %v1000
  %vm1357 = vcmp.eq.f32.partialorder %v1356, 8.507059e+37
  %v1358 = vand.u32 %v1000, 2147483648
  %v1359 = vor.u32 1.1754944e-38, %v1358
  %v1360 = vsel %vm1357, %v1359, %v1355
  %v1361 = vmul.f32 1.0, %v1360
  %v1362 = vrcp.pop %v1001
  %v1363 = vmul.f32 %v1001, %v1362
  %v1364 = vsub.f32 1.0, %v1363
  %v1365 = vmul.f32 %v1362, %v1364
  %v1366 = vadd.f32 %v1362, %v1365
  %vm1367 = vweird.f32 %v1001
  %vm1368 = vweird.f32 %v1362
  %vm1369 = vmor %vm1367, %vm1368
  %v1370 = vsel %vm1369, %v1362, %v1366
  %v1371 = vand.u32 2147483647, %v1001
  %vm1372 = vcmp.eq.f32.partialorder %v1371, 8.507059e+37
  %v1373 = vand.u32 %v1001, 2147483648
  %v1374 = vor.u32 1.1754944e-38, %v1373
  %v1375 = vsel %vm1372, %v1374, %v1370
  %v1376 = vmul.f32 1.0, %v1375
  %vm1377 = vcmask 7168
  %1378 = vst.msk [vmem:[%s9] sm:$0xff] %vm1377, %v1016
  %1379 = vst.msk [vmem:[%s9 + $0x8] sm:$0xff] %vm1377, %v1031
  %1380 = vst.msk [vmem:[%s9 + $0x10] sm:$0xff] %vm1377, %v1046
  %1381 = vst.msk [vmem:[%s9 + $0x18] sm:$0xff] %vm1377, %v1061
  %1382 = vst.msk [vmem:[%s9 + $0x20] sm:$0xff] %vm1377, %v1076
  %1383 = vst.msk [vmem:[%s9 + $0x28] sm:$0xff] %vm1377, %v1091
  %1384 = vst.msk [vmem:[%s9 + $0x30] sm:$0xff] %vm1377, %v1106
  %1385 = vst.msk [vmem:[%s9 + $0x38] sm:$0xff] %vm1377, %v1121
  %1386 = vst.msk [vmem:[%s9 + $0x40] sm:$0xff] %vm1377, %v1136
  %1387 = vst.msk [vmem:[%s9 + $0x48] sm:$0xff] %vm1377, %v1151
  %1388 = vst.msk [vmem:[%s9 + $0x50] sm:$0xff] %vm1377, %v1166
  %1389 = vst.msk [vmem:[%s9 + $0x58] sm:$0xff] %vm1377, %v1181
  %1390 = vst.msk [vmem:[%s9 + $0x60] sm:$0xff] %vm1377, %v1196
  %1391 = vst.msk [vmem:[%s9 + $0x68] sm:$0xff] %vm1377, %v1211
  %1392 = vst.msk [vmem:[%s9 + $0x70] sm:$0xff] %vm1377, %v1226
  %1393 = vst.msk [vmem:[%s9 + $0x78] sm:$0xff] %vm1377, %v1241
  %1394 = vst.msk [vmem:[%s9 + $0x80] sm:$0xff] %vm1377, %v1256
  %1395 = vst.msk [vmem:[%s9 + $0x88] sm:$0xff] %vm1377, %v1271
  %1396 = vst.msk [vmem:[%s9 + $0x90] sm:$0xff] %vm1377, %v1286
  %1397 = vst.msk [vmem:[%s9 + $0x98] sm:$0xff] %vm1377, %v1301
  %1398 = vst.msk [vmem:[%s9 + $0xa0] sm:$0xff] %vm1377, %v1316
  %1399 = vst.msk [vmem:[%s9 + $0xa8] sm:$0xff] %vm1377, %v1331
  %1400 = vst.msk [vmem:[%s9 + $0xb0] sm:$0xff] %vm1377, %v1346
  %1401 = vst.msk [vmem:[%s9 + $0xb8] sm:$0xff] %vm1377, %v1361
  %1402 = vst.msk [vmem:[%s9 + $0xc0] sm:$0xff] %vm1377, %v1376
  // Predicated region
  $region38: #{tpu_custom_call.1} parent=0 // pred_check
    _
  $region39: #{tpu_custom_call.1} parent=0 // pred_check_branch
    %1404 = sbr.rel (0) target = $region41
  $region40: #{tpu_custom_call.1} parent=0 // pred_region
    _
  $region41: #{tpu_custom_call.1} parent=0 // pred_fallthru
    _
  // Predicated region
  $region42: #{tpu_custom_call.1} parent=0 // pred_check
    _
  $region43: #{tpu_custom_call.1} parent=0 // pred_check_branch
    %1406 = sbr.rel (0) target = $region45
  $region44: #{tpu_custom_call.1} parent=0 // pred_region
    _
  $region45: #{tpu_custom_call.1} parent=0 // pred_fallthru
    _

</llo_original>
